<compile_context>
chip_gen: v7x
topology: tpu7x:2x2x1
jax: 0.10.0
libtpu: 0.0.40
codegen_flags: <defaults>
</compile_context>

<pallas_src>
import math
import functools

import jax
import jax.numpy as jnp
from jax import lax
from jax.experimental import pallas as pl
from jax.experimental.pallas import tpu as pltpu


# ----------------------------- in-kernel helpers -----------------------------

def _layernorm(x, gamma, beta, eps):
    mu = jnp.mean(x, axis=-1, keepdims=True)
    var = jnp.mean((x - mu) ** 2, axis=-1, keepdims=True)
    return (x - mu) * lax.rsqrt(var + eps) * gamma + beta


def _gelu(x):
    # tanh approximation (bert-pytorch GELU)
    # TODO(synk): if the reference uses torch.nn.GELU (erf), outputs differ slightly.
    return 0.5 * x * (1.0 + jnp.tanh(math.sqrt(2.0 / math.pi) * (x + 0.044715 * x ** 3)))


# --------------------------------- kernels -----------------------------------

def body_kernel(x_ref, emb_w_ref, emb_b_ref, pos_ref, cls_ref,
                wqkv_ref, bqkv_ref, wo_ref, bo_ref,
                g1_ref, be1_ref, w1_ref, b1_ref,
                w2_ref, b2_ref, g2_ref, be2_ref,
                o_ref, act_ref, *, num_heads):
    """Fused embedding + cls prepend + all transformer layers.

    grid = (B, L).  act_ref (VMEM scratch, (S1,H) f32) carries the activation
    across the layer axis; only the cls row is written to HBM at the last layer.
    """
    l = pl.program_id(1)
    n_layers = pl.num_programs(1)

    # ---- l == 0: BERT embedding (VPU FMA over C) + prepend cls into scratch ----
    @pl.when(l == 0)
    def _():
        xr = x_ref[0]                                   # (S, C) f32
        C = xr.shape[-1]
        h = emb_b_ref[...] + pos_ref[...]               # (S, H) broadcast
        for c in range(C):                              # K=C contraction on the VPU
            h = h + xr[:, c:c + 1] * emb_w_ref[c:c + 1, :]
        act_ref[0:1, :] = cls_ref[...]                  # cls token at position 0
        act_ref[1:, :] = h                              # embedded data at 1..S

    x = act_ref[...]                                    # (S1, H) f32
    S1, H = x.shape
    dh = H // num_heads
    scale = 1.0 / math.sqrt(dh)
    bf16 = jnp.bfloat16

    # ------------------- multi-head self-attention sublayer --------------------
    h = _layernorm(x, g1_ref[0], be1_ref[0], eps=1e-6)
    qkv = jnp.dot(h.astype(bf16), wqkv_ref[0],
                  preferred_element_type=jnp.float32) + bqkv_ref[0]   # (S1, 3H)
    q, k, v = qkv[:, :H], qkv[:, H:2 * H], qkv[:, 2 * H:]

    wo = wo_ref[0]                                      # (H, H) bf16
    attn = jnp.zeros((S1, H), jnp.float32)
    for hd in range(num_heads):                         # static unroll (small)
        sl = slice(hd * dh, (hd + 1) * dh)
        qh = q[:, sl].astype(bf16)
        kh = k[:, sl].astype(bf16)
        vh = v[:, sl].astype(bf16)
        # scores = qh @ kh^T (contract last dims, no explicit transpose)
        scores = lax.dot_general(qh, kh, (((1,), (1,)), ((), ())),
                                 preferred_element_type=jnp.float32) * scale
        scores = scores - jnp.max(scores, axis=-1, keepdims=True)
        p = jnp.exp(scores)
        p = p * pl.reciprocal(jnp.sum(p, axis=-1, keepdims=True), approx=True)
        ctx = jnp.dot(p.astype(bf16), vh, preferred_element_type=jnp.float32)
        # project this head through its slice of W_o and accumulate (no concat).
        attn = attn + jnp.dot(ctx.astype(bf16), wo[sl, :],
                              preferred_element_type=jnp.float32)
    x = x + attn + bo_ref[0]                            # dropout == identity (eval)

    # -------------------- position-wise feed-forward sublayer ------------------
    h2 = _layernorm(x, g2_ref[0], be2_ref[0], eps=1e-6)
    ff = _gelu(jnp.dot(h2.astype(bf16), w1_ref[0],
                       preferred_element_type=jnp.float32) + b1_ref[0])
    ff = jnp.dot(ff.astype(bf16), w2_ref[0],
                 preferred_element_type=jnp.float32) + b2_ref[0]
    x = x + ff

    act_ref[...] = x

    @pl.when(l == n_layers - 1)
    def _():
        o_ref[0] = x[0:1, :]                            # only the cls row leaves VMEM


def head_kernel(cls_ref, g_ref, b_ref, w_ref, bw_ref, o_ref):
    # mlp_head (LayerNorm + Linear(H,1)) on the cls activation, then sigmoid.
    h = _layernorm(cls_ref[...], g_ref[...], b_ref[...], eps=1e-5)
    logit = jnp.dot(h, w_ref[...], preferred_element_type=jnp.float32) + bw_ref[...]
    o_ref[...] = jax.nn.sigmoid(logit)                  # (B, 1)


# --------------------------------- wrappers ----------------------------------

def run_body(x, p, num_heads):
    B, S, C = x.shape
    H = p["emb_w"].shape[1]
    S1 = S + 1
    L = p["wqkv"].shape[0]
    FF = p["w1"].shape[2]

    def wspec(shape):   # per-layer stacked weights, indexed by the layer axis
        return pl.BlockSpec(shape, lambda b, l: (l, 0, 0))

    def cspec(shape):   # shared (embedding) constants
        return pl.BlockSpec(shape, lambda b, l: (0, 0))

    # explicit VMEM budget: bf16 matrices + f32 biases/LN, double buffered, + slack.
    wbytes = 2 * (H * 3 * H + H * H + H * FF + FF * H)
    pbytes = 4 * (3 * H + 8 * H + FF)
    abytes = 4 * (2 * S1 * H + S * C + S * H + C * H + 4 * H)
    budget = 3 * (wbytes + pbytes) + 4 * abytes + (2 << 20)
    vmem_limit = int(min(max(budget, 16 * 1024 * 1024), 48 * 1024 * 1024))

    kernel = functools.partial(body_kernel, num_heads=num_heads)
    return pl.pallas_call(
        kernel,
        out_shape=jax.ShapeDtypeStruct((B, 1, H), jnp.float32),
        grid=(B, L),
        in_specs=[
            pl.BlockSpec((1, S, C), lambda b, l: (b, 0, 0)),   # x
            cspec((C, H)), cspec((1, H)), cspec((S, H)), cspec((1, H)),  # emb_w/b, pos, cls
            wspec((1, H, 3 * H)), wspec((1, 1, 3 * H)),        # wqkv, bqkv
            wspec((1, H, H)), wspec((1, 1, H)),                # wo, bo
            wspec((1, 1, H)), wspec((1, 1, H)),                # g1, be1
            wspec((1, H, FF)), wspec((1, 1, FF)),              # w1, b1
            wspec((1, FF, H)), wspec((1, 1, H)),               # w2, b2
            wspec((1, 1, H)), wspec((1, 1, H)),                # g2, be2
        ],
        out_specs=pl.BlockSpec((1, 1, H), lambda b, l: (b, 0, 0)),
        scratch_shapes=[pltpu.VMEM((S1, H), jnp.float32)],
        compiler_params=pltpu.CompilerParams(
            dimension_semantics=("parallel", "arbitrary"),
            vmem_limit_bytes=vmem_limit),
    )(x, p["emb_w"], p["emb_b"], p["pos"], p["cls_token"],
      p["wqkv"], p["bqkv"], p["wo"], p["bo"],
      p["g1"], p["be1"], p["w1"], p["b1"],
      p["w2"], p["b2"], p["g2"], p["be2"])


def run_head(cls_act, g, b, w, bw):
    B = cls_act.shape[0]
    return pl.pallas_call(
        head_kernel,
        out_shape=jax.ShapeDtypeStruct((B, 1), jnp.float32),
    )(cls_act, g, b, w, bw)


def discriminator_forward(x, params, num_heads):
    cls_act = run_body(x, params, num_heads)            # (B, 1, H) — cls rows only
    B, _, H = cls_act.shape
    return run_head(cls_act.reshape(B, H), params["head_g"], params["head_b"],
                    params["head_w"], params["head_bw"])


# --------------------------- deterministic parameters -------------------------

def sinusoidal_pos_emb(S, H):
    pos = jnp.arange(S, dtype=jnp.float32)[:, None]
    i = jnp.arange(H, dtype=jnp.float32)[None, :]
    angle = pos / jnp.power(10000.0, (2.0 * jnp.floor(i / 2.0)) / H)
    return jnp.where(i % 2 == 0, jnp.sin(angle), jnp.cos(angle)).astype(jnp.float32)


def init_params(key, C, H, FF, n_layers, S):
    def nrm(k, shp):
        return 0.02 * jax.random.normal(k, shp, jnp.float32)
    k = jax.random.split(key, 8)
    bf16 = jnp.bfloat16
    return {
        "emb_w": nrm(k[0], (C, H)),
        "emb_b": jnp.zeros((1, H), jnp.float32),
        "pos": sinusoidal_pos_emb(S, H),
        "cls_token": jax.random.uniform(k[1], (1, H), jnp.float32),   # torch.rand
        "head_g": jnp.ones((1, H), jnp.float32),
        "head_b": jnp.zeros((1, H), jnp.float32),
        "head_w": nrm(k[2], (H, 1)),
        "head_bw": jnp.zeros((1, 1), jnp.float32),
        # stacked per-layer transformer weights (matrices in bf16 for the MXU)
        "wqkv": nrm(k[3], (n_layers, H, 3 * H)).astype(bf16),
        "bqkv": jnp.zeros((n_layers, 1, 3 * H), jnp.float32),
        "wo":   nrm(k[4], (n_layers, H, H)).astype(bf16),
        "bo":   jnp.zeros((n_layers, 1, H), jnp.float32),
        "g1":   jnp.ones((n_layers, 1, H), jnp.float32),
        "be1":  jnp.zeros((n_layers, 1, H), jnp.float32),
        "w1":   nrm(k[5], (n_layers, H, FF)).astype(bf16),
        "b1":   jnp.zeros((n_layers, 1, FF), jnp.float32),
        "w2":   nrm(k[6], (n_layers, FF, H)).astype(bf16),
        "b2":   jnp.zeros((n_layers, 1, H), jnp.float32),
        "g2":   jnp.ones((n_layers, 1, H), jnp.float32),
        "be2":  jnp.zeros((n_layers, 1, H), jnp.float32),
    }


# ------------------------------------ main ------------------------------------

if __name__ == "__main__":
    # small config consistent with Discriminator(in_channels=3, hidden, n_layers, attn_heads)
    B, S, C = 2, 8, 3
    H, NUM_HEADS, N_LAYERS = 32, 2, 2
    FF = 4 * H

    key = jax.random.PRNGKey(0)
    k_param, k_x = jax.random.split(key)
    params = init_params(k_param, C, H, FF, N_LAYERS, S)
    x = jax.random.normal(k_x, (B, S, C), jnp.float32)

    out = discriminator_forward(x, params, NUM_HEADS)
    out = jax.block_until_ready(out)
    assert out.shape == (B, 1), out.shape
    assert bool(jnp.all(jnp.isfinite(out)))
    assert bool(jnp.all((out >= 0.0) & (out <= 1.0)))
    print("KERNEL_OK")
</pallas_src>

<mosaic_0001>
module attributes {stable_mosaic.version = 11 : i64} {
  func.func @body_kernel(%arg0: i32, %arg1: i32, %arg2: memref<1x8x3xf32, #tpu.memory_space<vmem>>, %arg3: memref<3x32xf32, #tpu.memory_space<vmem>>, %arg4: memref<1x32xf32, #tpu.memory_space<vmem>>, %arg5: memref<8x32xf32, #tpu.memory_space<vmem>>, %arg6: memref<1x32xf32, #tpu.memory_space<vmem>>, %arg7: memref<1x32x96xbf16, #tpu.memory_space<vmem>>, %arg8: memref<1x1x96xf32, #tpu.memory_space<vmem>>, %arg9: memref<1x32x32xbf16, #tpu.memory_space<vmem>>, %arg10: memref<1x1x32xf32, #tpu.memory_space<vmem>>, %arg11: memref<1x1x32xf32, #tpu.memory_space<vmem>>, %arg12: memref<1x1x32xf32, #tpu.memory_space<vmem>>, %arg13: memref<1x32x128xbf16, #tpu.memory_space<vmem>>, %arg14: memref<1x1x128xf32, #tpu.memory_space<vmem>>, %arg15: memref<1x128x32xbf16, #tpu.memory_space<vmem>>, %arg16: memref<1x1x32xf32, #tpu.memory_space<vmem>>, %arg17: memref<1x1x32xf32, #tpu.memory_space<vmem>>, %arg18: memref<1x1x32xf32, #tpu.memory_space<vmem>>, %arg19: memref<1x1x32xf32, #tpu.memory_space<vmem>>, %arg20: memref<9x32xf32, #tpu.memory_space<vmem>>) attributes {dimension_semantics = [#tpu.dimension_semantics<parallel>, #tpu.dimension_semantics<arbitrary>], iteration_bounds = array<i64: 2, 2>, scalar_prefetch = 0 : i64, scratch_operands = 1 : i64, tpu.core_type = #tpu.core_type<tc>, window_params = [{transform_indices = @transform_0, window_bounds = array<i64: 1, 8, 3>}, {pipeline_mode = #tpu.pipeline_mode<synchronous>, transform_indices = @transform_1, window_bounds = array<i64: 3, 32>}, {pipeline_mode = #tpu.pipeline_mode<synchronous>, transform_indices = @transform_2, window_bounds = array<i64: 1, 32>}, {pipeline_mode = #tpu.pipeline_mode<synchronous>, transform_indices = @transform_3, window_bounds = array<i64: 8, 32>}, {pipeline_mode = #tpu.pipeline_mode<synchronous>, transform_indices = @transform_4, window_bounds = array<i64: 1, 32>}, {transform_indices = @transform_5, window_bounds = array<i64: 1, 32, 96>}, {transform_indices = @transform_6, window_bounds = array<i64: 1, 1, 96>}, {transform_indices = @transform_7, window_bounds = array<i64: 1, 32, 32>}, {transform_indices = @transform_8, window_bounds = array<i64: 1, 1, 32>}, {transform_indices = @transform_9, window_bounds = array<i64: 1, 1, 32>}, {transform_indices = @transform_10, window_bounds = array<i64: 1, 1, 32>}, {transform_indices = @transform_11, window_bounds = array<i64: 1, 32, 128>}, {transform_indices = @transform_12, window_bounds = array<i64: 1, 1, 128>}, {transform_indices = @transform_13, window_bounds = array<i64: 1, 128, 32>}, {transform_indices = @transform_14, window_bounds = array<i64: 1, 1, 32>}, {transform_indices = @transform_15, window_bounds = array<i64: 1, 1, 32>}, {transform_indices = @transform_16, window_bounds = array<i64: 1, 1, 32>}, {transform_indices = @transform_17, window_bounds = array<i64: 1, 1, 32>}]} {
    %c0_i32 = arith.constant 0 : i32
    %0 = arith.cmpi eq, %arg1, %c0_i32 : i32
    %1 = arith.extui %0 : i1 to i32
    %c0_i32_0 = arith.constant 0 : i32
    %2 = arith.cmpi ne, %1, %c0_i32_0 : i32
    scf.if %2 {
      %c0_70 = arith.constant 0 : index
      %c0_71 = arith.constant 0 : index
      %c0_72 = arith.constant 0 : index
      %159 = vector.load %arg2[%c0_70, %c0_71, %c0_72] : memref<1x8x3xf32, #tpu.memory_space<vmem>>, vector<1x8x3xf32>
      %160 = vector.shape_cast %159 : vector<1x8x3xf32> to vector<8x3xf32>
      %c0_73 = arith.constant 0 : index
      %c0_74 = arith.constant 0 : index
      %161 = vector.load %arg4[%c0_73, %c0_74] : memref<1x32xf32, #tpu.memory_space<vmem>>, vector<1x32xf32>
      %c0_75 = arith.constant 0 : index
      %c0_76 = arith.constant 0 : index
      %162 = vector.load %arg5[%c0_75, %c0_76] : memref<8x32xf32, #tpu.memory_space<vmem>>, vector<8x32xf32>
      %163 = vector.broadcast %161 : vector<1x32xf32> to vector<8x32xf32>
      %164 = arith.addf %163, %162 : vector<8x32xf32>
      %165 = vector.extract_strided_slice %160 {offsets = [0, 0], sizes = [8, 1], strides = [1, 1]} : vector<8x3xf32> to vector<8x1xf32>
      %c0_77 = arith.constant 0 : index
      %c0_78 = arith.constant 0 : index
      %166 = vector.load %arg3[%c0_77, %c0_78] : memref<3x32xf32, #tpu.memory_space<vmem>>, vector<1x32xf32>
      %167 = vector.broadcast %165 : vector<8x1xf32> to vector<8x32xf32>
      %168 = vector.broadcast %166 : vector<1x32xf32> to vector<8x32xf32>
      %169 = arith.mulf %167, %168 : vector<8x32xf32>
      %170 = arith.addf %164, %169 : vector<8x32xf32>
      %171 = vector.extract_strided_slice %160 {offsets = [0, 1], sizes = [8, 1], strides = [1, 1]} : vector<8x3xf32> to vector<8x1xf32>
      %c1 = arith.constant 1 : index
      %c0_79 = arith.constant 0 : index
      %172 = vector.load %arg3[%c1, %c0_79] : memref<3x32xf32, #tpu.memory_space<vmem>>, vector<1x32xf32>
      %173 = vector.broadcast %171 : vector<8x1xf32> to vector<8x32xf32>
      %174 = vector.broadcast %172 : vector<1x32xf32> to vector<8x32xf32>
      %175 = arith.mulf %173, %174 : vector<8x32xf32>
      %176 = arith.addf %170, %175 : vector<8x32xf32>
      %177 = vector.extract_strided_slice %160 {offsets = [0, 2], sizes = [8, 1], strides = [1, 1]} : vector<8x3xf32> to vector<8x1xf32>
      %c2 = arith.constant 2 : index
      %c0_80 = arith.constant 0 : index
      %178 = vector.load %arg3[%c2, %c0_80] : memref<3x32xf32, #tpu.memory_space<vmem>>, vector<1x32xf32>
      %179 = vector.broadcast %177 : vector<8x1xf32> to vector<8x32xf32>
      %180 = vector.broadcast %178 : vector<1x32xf32> to vector<8x32xf32>
      %181 = arith.mulf %179, %180 : vector<8x32xf32>
      %182 = arith.addf %176, %181 : vector<8x32xf32>
      %c0_81 = arith.constant 0 : index
      %c0_82 = arith.constant 0 : index
      %183 = vector.load %arg6[%c0_81, %c0_82] : memref<1x32xf32, #tpu.memory_space<vmem>>, vector<1x32xf32>
      %c0_83 = arith.constant 0 : index
      %c0_84 = arith.constant 0 : index
      %184 = vector.load %arg20[%c0_83, %c0_84] : memref<9x32xf32, #tpu.memory_space<vmem>>, vector<1x32xf32>
      tpu.vector_store %arg20[%c0_83, %c0_84], %183 {strides = array<i32>} : memref<9x32xf32, #tpu.memory_space<vmem>>, vector<1x32xf32>,
      %c1_85 = arith.constant 1 : index
      %c0_86 = arith.constant 0 : index
      %185 = vector.load %arg20[%c1_85, %c0_86] : memref<9x32xf32, #tpu.memory_space<vmem>>, vector<8x32xf32>
      tpu.vector_store %arg20[%c1_85, %c0_86], %182 {strides = array<i32>} : memref<9x32xf32, #tpu.memory_space<vmem>>, vector<8x32xf32>,
    } else {
    }
    %c0 = arith.constant 0 : index
    %c0_1 = arith.constant 0 : index
    %3 = vector.load %arg20[%c0, %c0_1] : memref<9x32xf32, #tpu.memory_space<vmem>>, vector<9x32xf32>
    %c0_2 = arith.constant 0 : index
    %c0_3 = arith.constant 0 : index
    %c0_4 = arith.constant 0 : index
    %4 = vector.load %arg11[%c0_2, %c0_3, %c0_4] : memref<1x1x32xf32, #tpu.memory_space<vmem>>, vector<1x1x32xf32>
    %5 = vector.shape_cast %4 : vector<1x1x32xf32> to vector<1x32xf32>
    %c0_5 = arith.constant 0 : index
    %c0_6 = arith.constant 0 : index
    %c0_7 = arith.constant 0 : index
    %6 = vector.load %arg12[%c0_5, %c0_6, %c0_7] : memref<1x1x32xf32, #tpu.memory_space<vmem>>, vector<1x1x32xf32>
    %7 = vector.shape_cast %6 : vector<1x1x32xf32> to vector<1x32xf32>
    %cst = arith.constant dense<0.000000e+00> : vector<9xf32>
    %8 = vector.multi_reduction <add>, %3, %cst [1] : vector<9x32xf32> to vector<9xf32>
    %9 = vector.shape_cast %8 : vector<9xf32> to vector<9x1xf32>
    %cst_8 = arith.constant 3.200000e+01 : f32
    %10 = vector.broadcast %cst_8 : f32 to vector<9x1xf32>
    %11 = arith.divf %9, %10 : vector<9x1xf32>
    %12 = vector.broadcast %11 : vector<9x1xf32> to vector<9x32xf32>
    %13 = arith.subf %3, %12 : vector<9x32xf32>
    %14 = arith.mulf %13, %13 : vector<9x32xf32>
    %cst_9 = arith.constant dense<0.000000e+00> : vector<9xf32>
    %15 = vector.multi_reduction <add>, %14, %cst_9 [1] : vector<9x32xf32> to vector<9xf32>
    %16 = vector.shape_cast %15 : vector<9xf32> to vector<9x1xf32>
    %cst_10 = arith.constant 3.200000e+01 : f32
    %17 = vector.broadcast %cst_10 : f32 to vector<9x1xf32>
    %18 = arith.divf %16, %17 : vector<9x1xf32>
    %19 = vector.broadcast %11 : vector<9x1xf32> to vector<9x32xf32>
    %20 = arith.subf %3, %19 : vector<9x32xf32>
    %cst_11 = arith.constant 9.99999997E-7 : f32
    %21 = vector.broadcast %cst_11 : f32 to vector<9x1xf32>
    %22 = arith.addf %18, %21 : vector<9x1xf32>
    %23 = math.rsqrt %22 : vector<9x1xf32>
    %24 = vector.broadcast %23 : vector<9x1xf32> to vector<9x32xf32>
    %25 = arith.mulf %20, %24 : vector<9x32xf32>
    %26 = vector.broadcast %5 : vector<1x32xf32> to vector<9x32xf32>
    %27 = arith.mulf %25, %26 : vector<9x32xf32>
    %28 = vector.broadcast %7 : vector<1x32xf32> to vector<9x32xf32>
    %29 = arith.addf %27, %28 : vector<9x32xf32>
    %30 = arith.truncf %29 : vector<9x32xf32> to vector<9x32xbf16>
    %c0_12 = arith.constant 0 : index
    %c0_13 = arith.constant 0 : index
    %c0_14 = arith.constant 0 : index
    %31 = vector.load %arg7[%c0_12, %c0_13, %c0_14] : memref<1x32x96xbf16, #tpu.memory_space<vmem>>, vector<1x32x96xbf16>
    %32 = vector.shape_cast %31 : vector<1x32x96xbf16> to vector<32x96xbf16>
    %cst_15 = arith.constant dense<0.000000e+00> : vector<9x96xf32>
    %33 = tpu.matmul %30, %32, %cst_15 {dimension_numbers = #tpu.dot_dimension_numbers<[1], [0], [0], [1], [0, 0, 1, 1], [], []>} : vector<9x32xbf16>, vector<32x96xbf16>, vector<9x96xf32> -> vector<9x96xf32>
    %c0_16 = arith.constant 0 : index
    %c0_17 = arith.constant 0 : index
    %c0_18 = arith.constant 0 : index
    %34 = vector.load %arg8[%c0_16, %c0_17, %c0_18] : memref<1x1x96xf32, #tpu.memory_space<vmem>>, vector<1x1x96xf32>
    %35 = vector.shape_cast %34 : vector<1x1x96xf32> to vector<1x96xf32>
    %36 = vector.broadcast %35 : vector<1x96xf32> to vector<9x96xf32>
    %37 = arith.addf %33, %36 : vector<9x96xf32>
    %38 = vector.extract_strided_slice %37 {offsets = [0, 0], sizes = [9, 32], strides = [1, 1]} : vector<9x96xf32> to vector<9x32xf32>
    %39 = vector.extract_strided_slice %37 {offsets = [0, 32], sizes = [9, 32], strides = [1, 1]} : vector<9x96xf32> to vector<9x32xf32>
    %40 = vector.extract_strided_slice %37 {offsets = [0, 64], sizes = [9, 32], strides = [1, 1]} : vector<9x96xf32> to vector<9x32xf32>
    %c0_19 = arith.constant 0 : index
    %c0_20 = arith.constant 0 : index
    %c0_21 = arith.constant 0 : index
    %41 = vector.load %arg9[%c0_19, %c0_20, %c0_21] : memref<1x32x32xbf16, #tpu.memory_space<vmem>>, vector<1x32x32xbf16>
    %42 = vector.shape_cast %41 : vector<1x32x32xbf16> to vector<32x32xbf16>
    %cst_22 = arith.constant 0.000000e+00 : f32
    %43 = vector.broadcast %cst_22 : f32 to vector<9x32xf32>
    %44 = vector.extract_strided_slice %38 {offsets = [0, 0], sizes = [9, 16], strides = [1, 1]} : vector<9x32xf32> to vector<9x16xf32>
    %45 = arith.truncf %44 : vector<9x16xf32> to vector<9x16xbf16>
    %46 = vector.extract_strided_slice %39 {offsets = [0, 0], sizes = [9, 16], strides = [1, 1]} : vector<9x32xf32> to vector<9x16xf32>
    %47 = arith.truncf %46 : vector<9x16xf32> to vector<9x16xbf16>
    %48 = vector.extract_strided_slice %40 {offsets = [0, 0], sizes = [9, 16], strides = [1, 1]} : vector<9x32xf32> to vector<9x16xf32>
    %49 = arith.truncf %48 : vector<9x16xf32> to vector<9x16xbf16>
    %cst_23 = arith.constant dense<0.000000e+00> : vector<9x9xf32>
    %50 = tpu.matmul %45, %47, %cst_23 {dimension_numbers = #tpu.dot_dimension_numbers<[1], [1], [0], [0], [0, 0, 1, 0], [], []>} : vector<9x16xbf16>, vector<9x16xbf16>, vector<9x9xf32> -> vector<9x9xf32>
    %cst_24 = arith.constant 2.500000e-01 : f32
    %51 = vector.broadcast %cst_24 : f32 to vector<9x9xf32>
    %52 = arith.mulf %50, %51 : vector<9x9xf32>
    %cst_25 = arith.constant dense<0xFF800000> : vector<9xf32>
    %53 = vector.multi_reduction <maximumf>, %52, %cst_25 [1] : vector<9x9xf32> to vector<9xf32>
    %54 = vector.shape_cast %53 : vector<9xf32> to vector<9x1xf32>
    %55 = vector.broadcast %54 : vector<9x1xf32> to vector<9x9xf32>
    %56 = arith.subf %52, %55 : vector<9x9xf32>
    %57 = math.exp %56 : vector<9x9xf32>
    %cst_26 = arith.constant dense<0.000000e+00> : vector<9xf32>
    %58 = vector.multi_reduction <add>, %57, %cst_26 [1] : vector<9x9xf32> to vector<9xf32>
    %59 = vector.shape_cast %58 : vector<9xf32> to vector<9x1xf32>
    %60 = tpu.reciprocal %59 {approx = true} : vector<9x1xf32> -> vector<9x1xf32>
    %61 = vector.broadcast %60 : vector<9x1xf32> to vector<9x9xf32>
    %62 = arith.mulf %57, %61 : vector<9x9xf32>
    %63 = arith.truncf %62 : vector<9x9xf32> to vector<9x9xbf16>
    %cst_27 = arith.constant dense<0.000000e+00> : vector<9x16xf32>
    %64 = tpu.matmul %63, %49, %cst_27 {dimension_numbers = #tpu.dot_dimension_numbers<[1], [0], [0], [1], [0, 0, 1, 1], [], []>} : vector<9x9xbf16>, vector<9x16xbf16>, vector<9x16xf32> -> vector<9x16xf32>
    %65 = arith.truncf %64 : vector<9x16xf32> to vector<9x16xbf16>
    %66 = vector.extract_strided_slice %42 {offsets = [0, 0], sizes = [16, 32], strides = [1, 1]} : vector<32x32xbf16> to vector<16x32xbf16>
    %cst_28 = arith.constant dense<0.000000e+00> : vector<9x32xf32>
    %67 = tpu.matmul %65, %66, %cst_28 {dimension_numbers = #tpu.dot_dimension_numbers<[1], [0], [0], [1], [0, 0, 1, 1], [], []>} : vector<9x16xbf16>, vector<16x32xbf16>, vector<9x32xf32> -> vector<9x32xf32>
    %68 = arith.addf %43, %67 : vector<9x32xf32>
    %69 = vector.extract_strided_slice %38 {offsets = [0, 16], sizes = [9, 16], strides = [1, 1]} : vector<9x32xf32> to vector<9x16xf32>
    %70 = arith.truncf %69 : vector<9x16xf32> to vector<9x16xbf16>
    %71 = vector.extract_strided_slice %39 {offsets = [0, 16], sizes = [9, 16], strides = [1, 1]} : vector<9x32xf32> to vector<9x16xf32>
    %72 = arith.truncf %71 : vector<9x16xf32> to vector<9x16xbf16>
    %73 = vector.extract_strided_slice %40 {offsets = [0, 16], sizes = [9, 16], strides = [1, 1]} : vector<9x32xf32> to vector<9x16xf32>
    %74 = arith.truncf %73 : vector<9x16xf32> to vector<9x16xbf16>
    %cst_29 = arith.constant dense<0.000000e+00> : vector<9x9xf32>
    %75 = tpu.matmul %70, %72, %cst_29 {dimension_numbers = #tpu.dot_dimension_numbers<[1], [1], [0], [0], [0, 0, 1, 0], [], []>} : vector<9x16xbf16>, vector<9x16xbf16>, vector<9x9xf32> -> vector<9x9xf32>
    %cst_30 = arith.constant 2.500000e-01 : f32
    %76 = vector.broadcast %cst_30 : f32 to vector<9x9xf32>
    %77 = arith.mulf %75, %76 : vector<9x9xf32>
    %cst_31 = arith.constant dense<0xFF800000> : vector<9xf32>
    %78 = vector.multi_reduction <maximumf>, %77, %cst_31 [1] : vector<9x9xf32> to vector<9xf32>
    %79 = vector.shape_cast %78 : vector<9xf32> to vector<9x1xf32>
    %80 = vector.broadcast %79 : vector<9x1xf32> to vector<9x9xf32>
    %81 = arith.subf %77, %80 : vector<9x9xf32>
    %82 = math.exp %81 : vector<9x9xf32>
    %cst_32 = arith.constant dense<0.000000e+00> : vector<9xf32>
    %83 = vector.multi_reduction <add>, %82, %cst_32 [1] : vector<9x9xf32> to vector<9xf32>
    %84 = vector.shape_cast %83 : vector<9xf32> to vector<9x1xf32>
    %85 = tpu.reciprocal %84 {approx = true} : vector<9x1xf32> -> vector<9x1xf32>
    %86 = vector.broadcast %85 : vector<9x1xf32> to vector<9x9xf32>
    %87 = arith.mulf %82, %86 : vector<9x9xf32>
    %88 = arith.truncf %87 : vector<9x9xf32> to vector<9x9xbf16>
    %cst_33 = arith.constant dense<0.000000e+00> : vector<9x16xf32>
    %89 = tpu.matmul %88, %74, %cst_33 {dimension_numbers = #tpu.dot_dimension_numbers<[1], [0], [0], [1], [0, 0, 1, 1], [], []>} : vector<9x9xbf16>, vector<9x16xbf16>, vector<9x16xf32> -> vector<9x16xf32>
    %90 = arith.truncf %89 : vector<9x16xf32> to vector<9x16xbf16>
    %91 = vector.extract_strided_slice %42 {offsets = [16, 0], sizes = [16, 32], strides = [1, 1]} : vector<32x32xbf16> to vector<16x32xbf16>
    %cst_34 = arith.constant dense<0.000000e+00> : vector<9x32xf32>
    %92 = tpu.matmul %90, %91, %cst_34 {dimension_numbers = #tpu.dot_dimension_numbers<[1], [0], [0], [1], [0, 0, 1, 1], [], []>} : vector<9x16xbf16>, vector<16x32xbf16>, vector<9x32xf32> -> vector<9x32xf32>
    %93 = arith.addf %68, %92 : vector<9x32xf32>
    %94 = arith.addf %3, %93 : vector<9x32xf32>
    %c0_35 = arith.constant 0 : index
    %c0_36 = arith.constant 0 : index
    %c0_37 = arith.constant 0 : index
    %95 = vector.load %arg10[%c0_35, %c0_36, %c0_37] : memref<1x1x32xf32, #tpu.memory_space<vmem>>, vector<1x1x32xf32>
    %96 = vector.shape_cast %95 : vector<1x1x32xf32> to vector<1x32xf32>
    %97 = vector.broadcast %96 : vector<1x32xf32> to vector<9x32xf32>
    %98 = arith.addf %94, %97 : vector<9x32xf32>
    %c0_38 = arith.constant 0 : index
    %c0_39 = arith.constant 0 : index
    %c0_40 = arith.constant 0 : index
    %99 = vector.load %arg17[%c0_38, %c0_39, %c0_40] : memref<1x1x32xf32, #tpu.memory_space<vmem>>, vector<1x1x32xf32>
    %100 = vector.shape_cast %99 : vector<1x1x32xf32> to vector<1x32xf32>
    %c0_41 = arith.constant 0 : index
    %c0_42 = arith.constant 0 : index
    %c0_43 = arith.constant 0 : index
    %101 = vector.load %arg18[%c0_41, %c0_42, %c0_43] : memref<1x1x32xf32, #tpu.memory_space<vmem>>, vector<1x1x32xf32>
    %102 = vector.shape_cast %101 : vector<1x1x32xf32> to vector<1x32xf32>
    %cst_44 = arith.constant dense<0.000000e+00> : vector<9xf32>
    %103 = vector.multi_reduction <add>, %98, %cst_44 [1] : vector<9x32xf32> to vector<9xf32>
    %104 = vector.shape_cast %103 : vector<9xf32> to vector<9x1xf32>
    %cst_45 = arith.constant 3.200000e+01 : f32
    %105 = vector.broadcast %cst_45 : f32 to vector<9x1xf32>
    %106 = arith.divf %104, %105 : vector<9x1xf32>
    %107 = vector.broadcast %106 : vector<9x1xf32> to vector<9x32xf32>
    %108 = arith.subf %98, %107 : vector<9x32xf32>
    %109 = arith.mulf %108, %108 : vector<9x32xf32>
    %cst_46 = arith.constant dense<0.000000e+00> : vector<9xf32>
    %110 = vector.multi_reduction <add>, %109, %cst_46 [1] : vector<9x32xf32> to vector<9xf32>
    %111 = vector.shape_cast %110 : vector<9xf32> to vector<9x1xf32>
    %cst_47 = arith.constant 3.200000e+01 : f32
    %112 = vector.broadcast %cst_47 : f32 to vector<9x1xf32>
    %113 = arith.divf %111, %112 : vector<9x1xf32>
    %114 = vector.broadcast %106 : vector<9x1xf32> to vector<9x32xf32>
    %115 = arith.subf %98, %114 : vector<9x32xf32>
    %cst_48 = arith.constant 9.99999997E-7 : f32
    %116 = vector.broadcast %cst_48 : f32 to vector<9x1xf32>
    %117 = arith.addf %113, %116 : vector<9x1xf32>
    %118 = math.rsqrt %117 : vector<9x1xf32>
    %119 = vector.broadcast %118 : vector<9x1xf32> to vector<9x32xf32>
    %120 = arith.mulf %115, %119 : vector<9x32xf32>
    %121 = vector.broadcast %100 : vector<1x32xf32> to vector<9x32xf32>
    %122 = arith.mulf %120, %121 : vector<9x32xf32>
    %123 = vector.broadcast %102 : vector<1x32xf32> to vector<9x32xf32>
    %124 = arith.addf %122, %123 : vector<9x32xf32>
    %125 = arith.truncf %124 : vector<9x32xf32> to vector<9x32xbf16>
    %c0_49 = arith.constant 0 : index
    %c0_50 = arith.constant 0 : index
    %c0_51 = arith.constant 0 : index
    %126 = vector.load %arg13[%c0_49, %c0_50, %c0_51] : memref<1x32x128xbf16, #tpu.memory_space<vmem>>, vector<1x32x128xbf16>
    %127 = vector.shape_cast %126 : vector<1x32x128xbf16> to vector<32x128xbf16>
    %cst_52 = arith.constant dense<0.000000e+00> : vector<9x128xf32>
    %128 = tpu.matmul %125, %127, %cst_52 {dimension_numbers = #tpu.dot_dimension_numbers<[1], [0], [0], [1], [0, 0, 1, 1], [], []>} : vector<9x32xbf16>, vector<32x128xbf16>, vector<9x128xf32> -> vector<9x128xf32>
    %c0_53 = arith.constant 0 : index
    %c0_54 = arith.constant 0 : index
    %c0_55 = arith.constant 0 : index
    %129 = vector.load %arg14[%c0_53, %c0_54, %c0_55] : memref<1x1x128xf32, #tpu.memory_space<vmem>>, vector<1x1x128xf32>
    %130 = vector.shape_cast %129 : vector<1x1x128xf32> to vector<1x128xf32>
    %131 = vector.broadcast %130 : vector<1x128xf32> to vector<9x128xf32>
    %132 = arith.addf %128, %131 : vector<9x128xf32>
    %cst_56 = arith.constant 5.000000e-01 : f32
    %133 = vector.broadcast %cst_56 : f32 to vector<9x128xf32>
    %134 = arith.mulf %133, %132 : vector<9x128xf32>
    %135 = arith.mulf %132, %132 : vector<9x128xf32>
    %136 = arith.mulf %132, %135 : vector<9x128xf32>
    %cst_57 = arith.constant 4.471500e-02 : f32
    %137 = vector.broadcast %cst_57 : f32 to vector<9x128xf32>
    %138 = arith.mulf %137, %136 : vector<9x128xf32>
    %139 = arith.addf %132, %138 : vector<9x128xf32>
    %cst_58 = arith.constant 0.797884583 : f32
    %140 = vector.broadcast %cst_58 : f32 to vector<9x128xf32>
    %141 = arith.mulf %140, %139 : vector<9x128xf32>
    %142 = math.tanh %141 : vector<9x128xf32>
    %cst_59 = arith.constant 1.000000e+00 : f32
    %143 = vector.broadcast %cst_59 : f32 to vector<9x128xf32>
    %144 = arith.addf %143, %142 : vector<9x128xf32>
    %145 = arith.mulf %134, %144 : vector<9x128xf32>
    %146 = arith.truncf %145 : vector<9x128xf32> to vector<9x128xbf16>
    %c0_60 = arith.constant 0 : index
    %c0_61 = arith.constant 0 : index
    %c0_62 = arith.constant 0 : index
    %147 = vector.load %arg15[%c0_60, %c0_61, %c0_62] : memref<1x128x32xbf16, #tpu.memory_space<vmem>>, vector<1x128x32xbf16>
    %148 = vector.shape_cast %147 : vector<1x128x32xbf16> to vector<128x32xbf16>
    %cst_63 = arith.constant dense<0.000000e+00> : vector<9x32xf32>
    %149 = tpu.matmul %146, %148, %cst_63 {dimension_numbers = #tpu.dot_dimension_numbers<[1], [0], [0], [1], [0, 0, 1, 1], [], []>} : vector<9x128xbf16>, vector<128x32xbf16>, vector<9x32xf32> -> vector<9x32xf32>
    %c0_64 = arith.constant 0 : index
    %c0_65 = arith.constant 0 : index
    %c0_66 = arith.constant 0 : index
    %150 = vector.load %arg16[%c0_64, %c0_65, %c0_66] : memref<1x1x32xf32, #tpu.memory_space<vmem>>, vector<1x1x32xf32>
    %151 = vector.shape_cast %150 : vector<1x1x32xf32> to vector<1x32xf32>
    %152 = vector.broadcast %151 : vector<1x32xf32> to vector<9x32xf32>
    %153 = arith.addf %149, %152 : vector<9x32xf32>
    %154 = arith.addf %98, %153 : vector<9x32xf32>
    %c0_67 = arith.constant 0 : index
    %c0_68 = arith.constant 0 : index
    %155 = vector.load %arg20[%c0_67, %c0_68] : memref<9x32xf32, #tpu.memory_space<vmem>>, vector<9x32xf32>
    tpu.vector_store %arg20[%c0_67, %c0_68], %154 {strides = array<i32>} : memref<9x32xf32, #tpu.memory_space<vmem>>, vector<9x32xf32>,
    %c1_i32 = arith.constant 1 : i32
    %156 = arith.cmpi eq, %arg1, %c1_i32 : i32
    %157 = arith.extui %156 : i1 to i32
    %c0_i32_69 = arith.constant 0 : i32
    %158 = arith.cmpi ne, %157, %c0_i32_69 : i32
    scf.if %158 {
      %159 = vector.extract_strided_slice %154 {offsets = [0, 0], sizes = [1, 32], strides = [1, 1]} : vector<9x32xf32> to vector<1x32xf32>
      %c0_70 = arith.constant 0 : index
      %c0_71 = arith.constant 0 : index
      %c0_72 = arith.constant 0 : index
      %160 = vector.load %arg19[%c0_70, %c0_71, %c0_72] : memref<1x1x32xf32, #tpu.memory_space<vmem>>, vector<1x1x32xf32>
      %161 = vector.shape_cast %160 : vector<1x1x32xf32> to vector<1x32xf32>
      %162 = vector.shape_cast %159 : vector<1x32xf32> to vector<1x1x32xf32>
      tpu.vector_store %arg19[%c0_70, %c0_71, %c0_72], %162 {strides = array<i32>} : memref<1x1x32xf32, #tpu.memory_space<vmem>>, vector<1x1x32xf32>,
    } else {
    }
    return
  }
  func.func @transform_0(%arg0: i32, %arg1: i32) -> (i32, i32, i32) {
    %c0_i32 = arith.constant 0 : i32
    %c0_i32_0 = arith.constant 0 : i32
    %c0_i32_1 = arith.constant 0 : i32
    return %arg0, %c0_i32, %c0_i32_0 : i32, i32, i32
  }
  func.func @transform_1(%arg0: i32, %arg1: i32) -> (i32, i32) {
    %c0_i32 = arith.constant 0 : i32
    %c0_i32_0 = arith.constant 0 : i32
    %c0_i32_1 = arith.constant 0 : i32
    return %c0_i32, %c0_i32_0 : i32, i32
  }
  func.func @transform_2(%arg0: i32, %arg1: i32) -> (i32, i32) {
    %c0_i32 = arith.constant 0 : i32
    %c0_i32_0 = arith.constant 0 : i32
    %c0_i32_1 = arith.constant 0 : i32
    return %c0_i32, %c0_i32_0 : i32, i32
  }
  func.func @transform_3(%arg0: i32, %arg1: i32) -> (i32, i32) {
    %c0_i32 = arith.constant 0 : i32
    %c0_i32_0 = arith.constant 0 : i32
    %c0_i32_1 = arith.constant 0 : i32
    return %c0_i32, %c0_i32_0 : i32, i32
  }
  func.func @transform_4(%arg0: i32, %arg1: i32) -> (i32, i32) {
    %c0_i32 = arith.constant 0 : i32
    %c0_i32_0 = arith.constant 0 : i32
    %c0_i32_1 = arith.constant 0 : i32
    return %c0_i32, %c0_i32_0 : i32, i32
  }
  func.func @transform_5(%arg0: i32, %arg1: i32) -> (i32, i32, i32) {
    %c0_i32 = arith.constant 0 : i32
    %c0_i32_0 = arith.constant 0 : i32
    %c0_i32_1 = arith.constant 0 : i32
    return %arg1, %c0_i32, %c0_i32_0 : i32, i32, i32
  }
  func.func @transform_6(%arg0: i32, %arg1: i32) -> (i32, i32, i32) {
    %c0_i32 = arith.constant 0 : i32
    %c0_i32_0 = arith.constant 0 : i32
    %c0_i32_1 = arith.constant 0 : i32
    return %arg1, %c0_i32, %c0_i32_0 : i32, i32, i32
  }
  func.func @transform_7(%arg0: i32, %arg1: i32) -> (i32, i32, i32) {
    %c0_i32 = arith.constant 0 : i32
    %c0_i32_0 = arith.constant 0 : i32
    %c0_i32_1 = arith.constant 0 : i32
    return %arg1, %c0_i32, %c0_i32_0 : i32, i32, i32
  }
  func.func @transform_8(%arg0: i32, %arg1: i32) -> (i32, i32, i32) {
    %c0_i32 = arith.constant 0 : i32
    %c0_i32_0 = arith.constant 0 : i32
    %c0_i32_1 = arith.constant 0 : i32
    return %arg1, %c0_i32, %c0_i32_0 : i32, i32, i32
  }
  func.func @transform_9(%arg0: i32, %arg1: i32) -> (i32, i32, i32) {
    %c0_i32 = arith.constant 0 : i32
    %c0_i32_0 = arith.constant 0 : i32
    %c0_i32_1 = arith.constant 0 : i32
    return %arg1, %c0_i32, %c0_i32_0 : i32, i32, i32
  }
  func.func @transform_10(%arg0: i32, %arg1: i32) -> (i32, i32, i32) {
    %c0_i32 = arith.constant 0 : i32
    %c0_i32_0 = arith.constant 0 : i32
    %c0_i32_1 = arith.constant 0 : i32
    return %arg1, %c0_i32, %c0_i32_0 : i32, i32, i32
  }
  func.func @transform_11(%arg0: i32, %arg1: i32) -> (i32, i32, i32) {
    %c0_i32 = arith.constant 0 : i32
    %c0_i32_0 = arith.constant 0 : i32
    %c0_i32_1 = arith.constant 0 : i32
    return %arg1, %c0_i32, %c0_i32_0 : i32, i32, i32
  }
  func.func @transform_12(%arg0: i32, %arg1: i32) -> (i32, i32, i32) {
    %c0_i32 = arith.constant 0 : i32
    %c0_i32_0 = arith.constant 0 : i32
    %c0_i32_1 = arith.constant 0 : i32
    return %arg1, %c0_i32, %c0_i32_0 : i32, i32, i32
  }
  func.func @transform_13(%arg0: i32, %arg1: i32) -> (i32, i32, i32) {
    %c0_i32 = arith.constant 0 : i32
    %c0_i32_0 = arith.constant 0 : i32
    %c0_i32_1 = arith.constant 0 : i32
    return %arg1, %c0_i32, %c0_i32_0 : i32, i32, i32
  }
  func.func @transform_14(%arg0: i32, %arg1: i32) -> (i32, i32, i32) {
    %c0_i32 = arith.constant 0 : i32
    %c0_i32_0 = arith.constant 0 : i32
    %c0_i32_1 = arith.constant 0 : i32
    return %arg1, %c0_i32, %c0_i32_0 : i32, i32, i32
  }
  func.func @transform_15(%arg0: i32, %arg1: i32) -> (i32, i32, i32) {
    %c0_i32 = arith.constant 0 : i32
    %c0_i32_0 = arith.constant 0 : i32
    %c0_i32_1 = arith.constant 0 : i32
    return %arg1, %c0_i32, %c0_i32_0 : i32, i32, i32
  }
  func.func @transform_16(%arg0: i32, %arg1: i32) -> (i32, i32, i32) {
    %c0_i32 = arith.constant 0 : i32
    %c0_i32_0 = arith.constant 0 : i32
    %c0_i32_1 = arith.constant 0 : i32
    return %arg1, %c0_i32, %c0_i32_0 : i32, i32, i32
  }
  func.func @transform_17(%arg0: i32, %arg1: i32) -> (i32, i32, i32) {
    %c0_i32 = arith.constant 0 : i32
    %c0_i32_0 = arith.constant 0 : i32
    %c0_i32_1 = arith.constant 0 : i32
    return %arg0, %c0_i32, %c0_i32_0 : i32, i32, i32
  }
}

</mosaic_0001>

<llo_original>
// kernel: tpu_custom_call.1
$region0: #{tpu_custom_call.1}
  #allocation0 [shape = 'u32[]', space=smem, size = 0x4, offset = 0x4, fixed_abs, tag = 'smem constant byte address 0x4 - core index']
  #allocation1 [shape = 'u32[144,128]{1,0:T(1,128)}', space=vmem, size = 0x12000, scoped, tag = 'internal scratch']
  #allocation2 [shape = 'f32[9,32]{1,0:T(8,128)}', space=vmem, size = 0x2000, scoped, tag = 'scratch operand']
  %s0 = inlined_call_operand.vmem [shape: f32[2,8,3], index: 0, kind: input, shape index: {}]
  %s1 = inlined_call_operand.vmem [shape: f32[3,32], index: 1, kind: input, shape index: {}]
  %s2 = inlined_call_operand.vmem [shape: f32[1,32], index: 2, kind: input, shape index: {}]
  %s3 = inlined_call_operand.vmem [shape: f32[8,32], index: 3, kind: input, shape index: {}]
  %s4 = inlined_call_operand.vmem [shape: f32[1,32], index: 4, kind: input, shape index: {}]
  %s5 = inlined_call_operand.vmem [shape: bf16[2,32,96], index: 5, kind: input, shape index: {}]
  %s6 = inlined_call_operand.vmem [shape: f32[2,1,96], index: 6, kind: input, shape index: {}]
  %s7 = inlined_call_operand.vmem [shape: bf16[2,32,32], index: 7, kind: input, shape index: {}]
  %s8 = inlined_call_operand.vmem [shape: f32[2,1,32], index: 8, kind: input, shape index: {}]
  %s9 = inlined_call_operand.vmem [shape: f32[2,1,32], index: 9, kind: input, shape index: {}]
  %s10 = inlined_call_operand.vmem [shape: f32[2,1,32], index: 10, kind: input, shape index: {}]
  %s11 = inlined_call_operand.vmem [shape: bf16[2,32,128], index: 11, kind: input, shape index: {}]
  %s12 = inlined_call_operand.vmem [shape: f32[2,1,128], index: 12, kind: input, shape index: {}]
  %s13 = inlined_call_operand.vmem [shape: bf16[2,128,32], index: 13, kind: input, shape index: {}]
  %s14 = inlined_call_operand.vmem [shape: f32[2,1,32], index: 14, kind: input, shape index: {}]
  %s15 = inlined_call_operand.vmem [shape: f32[2,1,32], index: 15, kind: input, shape index: {}]
  %s16 = inlined_call_operand.vmem [shape: f32[2,1,32], index: 16, kind: input, shape index: {}]
  %s17 = inlined_call_operand.hbm [shape: f32[2,1,32], index: 17, kind: output, shape index: {}]
  %s18 = sld [smem:[#allocation0]]
  $region109: #{tpu_custom_call.1} parent=0
    _
  %s20 = ssub.s32 1, %s18
  %s21 = scalar_select 0, %s20, %s18
  $region1: #{tpu_custom_call.1} parent=0
    #allocation3 [shape = 'u8[1024]{0}', space=vmem, size = 0x400, scoped, tag = 'output window, operand 0']
    #allocation4 [shape = 's32[2]{0}', space=sflag, size = 0x8, scoped, tag = 'scoped memory for tpu_custom_call.1']
    %22 = vsyncpa [#allocation4], 0
    %s23 = scalar_lea.sflag [#allocation4], 1
    %24 = vsyncpa %s23, 0
    loop: start=0, step=1, limit=6
    $region2: #{tpu_custom_call.1} parent=1 // loop_pre_header
      _
    $region3: #{tpu_custom_call.1} parent=1 // loop_header
      %s26 = sphi 0, %s30
      %p27 = scmp.ge.s32.totalorder %s26, 6
      %s33 = sphi 0, %s45
      %s34 = sphi 0, %s41
      %s35 = sphi 0, %s33
      %s36 = sphi 0, %s34
      %s37 = sphi 0, %s35
      %s38 = sphi 0, %s36
      %s48 = sphi 0, %s50
      %s51 = sphi 0, %s48
      %s52 = sphi 0, %s51
      %s68 = sphi 0, %s52
      %s72 = sphi 0, %s72
      %s74 = sphi 0, %s72
      %s75 = sphi 0, %s74
      %s89 = sphi 0, %s75
      %s93 = sphi 0, %s93
      %s95 = sphi 0, %s93
      %s96 = sphi 0, %s95
      %s110 = sphi 0, %s96
      %s114 = sphi 0, %s114
      %s116 = sphi 0, %s114
      %s117 = sphi 0, %s116
      %s131 = sphi 0, %s117
      %s135 = sphi 0, %s135
      %s137 = sphi 0, %s135
      %s138 = sphi 0, %s137
      %s152 = sphi 0, %s138
      %s158 = sphi 0, %s160
      %s161 = sphi 0, %s158
      %s162 = sphi 0, %s161
      %s178 = sphi 0, %s162
      %s184 = sphi 0, %s186
      %s187 = sphi 0, %s184
      %s188 = sphi 0, %s187
      %s204 = sphi 0, %s188
      %s210 = sphi 0, %s212
      %s213 = sphi 0, %s210
      %s214 = sphi 0, %s213
      %s230 = sphi 0, %s214
      %s236 = sphi 0, %s238
      %s239 = sphi 0, %s236
      %s240 = sphi 0, %s239
      %s256 = sphi 0, %s240
      %s262 = sphi 0, %s264
      %s265 = sphi 0, %s262
      %s266 = sphi 0, %s265
      %s282 = sphi 0, %s266
      %s288 = sphi 0, %s290
      %s291 = sphi 0, %s288
      %s292 = sphi 0, %s291
      %s308 = sphi 0, %s292
      %s314 = sphi 0, %s316
      %s317 = sphi 0, %s314
      %s318 = sphi 0, %s317
      %s334 = sphi 0, %s318
      %s340 = sphi 0, %s342
      %s343 = sphi 0, %s340
      %s344 = sphi 0, %s343
      %s360 = sphi 0, %s344
      %s366 = sphi 0, %s368
      %s369 = sphi 0, %s366
      %s370 = sphi 0, %s369
      %s386 = sphi 0, %s370
      %s392 = sphi 0, %s394
      %s395 = sphi 0, %s392
      %s396 = sphi 0, %s395
      %s412 = sphi 0, %s396
      %s418 = sphi 0, %s420
      %s421 = sphi 0, %s418
      %s422 = sphi 0, %s421
      %s438 = sphi 0, %s422
      %s444 = sphi 0, %s446
      %s447 = sphi 0, %s444
      %s448 = sphi 0, %s447
      %s464 = sphi 0, %s448
      %s470 = sphi 0, %s472
      %s473 = sphi 0, %s470
      %s474 = sphi 0, %s473
      %s490 = sphi 0, %s474
    $region4: #{tpu_custom_call.1} parent=1 // loop_header_branch
      %29 = sbr.rel (%p27) target = $region8
    $region5: #{tpu_custom_call.1} parent=1 // loop_body
      %s31 = ssub.s32 %s26, 1
      %s32 = ssub.s32 %s26, 2
      %s39 = sadd.s32 1, %s34
      %p40 = scmp.ge.s32.totalorder %s39, 2
      %s41 = scalar_select %p40, 0, %s39
      %s42 = sadd.s32 1, %s33
      %s43 = scalar_select %p40, %s42, %s33
      %p44 = scmp.ge.s32.totalorder %s43, 2
      %s45 = scalar_select %p44, 0, %s43
      %s46 = ssub.s32 %s33, %s45
      %p47 = scmp.eq.s32.totalorder %s46, 0
      %s49 = sadd.s32 %s48, 1
      %s50 = scalar_select %p47, %s48, %s49
      %p53 = pneg %p47
      %p54 = scmp.eq.s32.totalorder %s26, 3
      %p55 = por %p53, %p54
      %p56 = scmp.ne.s32.totalorder %s48, %s51
      %p57 = scmp.eq.s32.totalorder %s26, 0
      %p58 = por %p56, %p57
      %p59 = scmp.ne.s32.totalorder %s48, %s51
      %p60 = scmp.eq.s32.totalorder %s31, 3
      %p61 = por %p59, %p60
      %p62 = scmp.ne.s32.totalorder %s51, %s52
      %p63 = scmp.eq.s32.totalorder %s31, 0
      %p64 = por %p62, %p63
      %p65 = scmp.ne.s32.totalorder %s51, %s52
      %p66 = scmp.eq.s32.totalorder %s32, 3
      %p67 = por %p65, %p66
      %p69 = scmp.ne.s32.totalorder %s52, %s68
      %p70 = scmp.eq.s32.totalorder %s32, 0
      %p71 = por %p69, %p70
      %s73 = sadd.s32 %s72, 1
      %p76 = scmp.eq.s32.totalorder %s26, 3
      %p77 = scmp.ne.s32.totalorder %s72, %s74
      %p78 = scmp.eq.s32.totalorder %s26, 0
      %p79 = por %p77, %p78
      %p80 = scmp.ne.s32.totalorder %s72, %s74
      %p81 = scmp.eq.s32.totalorder %s31, 3
      %p82 = por %p80, %p81
      %p83 = scmp.ne.s32.totalorder %s74, %s75
      %p84 = scmp.eq.s32.totalorder %s31, 0
      %p85 = por %p83, %p84
      %p86 = scmp.ne.s32.totalorder %s74, %s75
      %p87 = scmp.eq.s32.totalorder %s32, 3
      %p88 = por %p86, %p87
      %p90 = scmp.ne.s32.totalorder %s75, %s89
      %p91 = scmp.eq.s32.totalorder %s32, 0
      %p92 = por %p90, %p91
      %s94 = sadd.s32 %s93, 1
      %p97 = scmp.eq.s32.totalorder %s26, 3
      %p98 = scmp.ne.s32.totalorder %s93, %s95
      %p99 = scmp.eq.s32.totalorder %s26, 0
      %p100 = por %p98, %p99
      %p101 = scmp.ne.s32.totalorder %s93, %s95
      %p102 = scmp.eq.s32.totalorder %s31, 3
      %p103 = por %p101, %p102
      %p104 = scmp.ne.s32.totalorder %s95, %s96
      %p105 = scmp.eq.s32.totalorder %s31, 0
      %p106 = por %p104, %p105
      %p107 = scmp.ne.s32.totalorder %s95, %s96
      %p108 = scmp.eq.s32.totalorder %s32, 3
      %p109 = por %p107, %p108
      %p111 = scmp.ne.s32.totalorder %s96, %s110
      %p112 = scmp.eq.s32.totalorder %s32, 0
      %p113 = por %p111, %p112
      %s115 = sadd.s32 %s114, 1
      %p118 = scmp.eq.s32.totalorder %s26, 3
      %p119 = scmp.ne.s32.totalorder %s114, %s116
      %p120 = scmp.eq.s32.totalorder %s26, 0
      %p121 = por %p119, %p120
      %p122 = scmp.ne.s32.totalorder %s114, %s116
      %p123 = scmp.eq.s32.totalorder %s31, 3
      %p124 = por %p122, %p123
      %p125 = scmp.ne.s32.totalorder %s116, %s117
      %p126 = scmp.eq.s32.totalorder %s31, 0
      %p127 = por %p125, %p126
      %p128 = scmp.ne.s32.totalorder %s116, %s117
      %p129 = scmp.eq.s32.totalorder %s32, 3
      %p130 = por %p128, %p129
      %p132 = scmp.ne.s32.totalorder %s117, %s131
      %p133 = scmp.eq.s32.totalorder %s32, 0
      %p134 = por %p132, %p133
      %s136 = sadd.s32 %s135, 1
      %p139 = scmp.eq.s32.totalorder %s26, 3
      %p140 = scmp.ne.s32.totalorder %s135, %s137
      %p141 = scmp.eq.s32.totalorder %s26, 0
      %p142 = por %p140, %p141
      %p143 = scmp.ne.s32.totalorder %s135, %s137
      %p144 = scmp.eq.s32.totalorder %s31, 3
      %p145 = por %p143, %p144
      %p146 = scmp.ne.s32.totalorder %s137, %s138
      %p147 = scmp.eq.s32.totalorder %s31, 0
      %p148 = por %p146, %p147
      %p149 = scmp.ne.s32.totalorder %s137, %s138
      %p150 = scmp.eq.s32.totalorder %s32, 3
      %p151 = por %p149, %p150
      %p153 = scmp.ne.s32.totalorder %s138, %s152
      %p154 = scmp.eq.s32.totalorder %s32, 0
      %p155 = por %p153, %p154
      %s156 = ssub.s32 %s34, %s41
      %p157 = scmp.eq.s32.totalorder %s156, 0
      %s159 = sadd.s32 %s158, 1
      %s160 = scalar_select %p157, %s158, %s159
      %p163 = pneg %p157
      %p164 = scmp.eq.s32.totalorder %s26, 3
      %p165 = por %p163, %p164
      %p166 = scmp.ne.s32.totalorder %s158, %s161
      %p167 = scmp.eq.s32.totalorder %s26, 0
      %p168 = por %p166, %p167
      %p169 = scmp.ne.s32.totalorder %s158, %s161
      %p170 = scmp.eq.s32.totalorder %s31, 3
      %p171 = por %p169, %p170
      %p172 = scmp.ne.s32.totalorder %s161, %s162
      %p173 = scmp.eq.s32.totalorder %s31, 0
      %p174 = por %p172, %p173
      %p175 = scmp.ne.s32.totalorder %s161, %s162
      %p176 = scmp.eq.s32.totalorder %s32, 3
      %p177 = por %p175, %p176
      %p179 = scmp.ne.s32.totalorder %s162, %s178
      %p180 = scmp.eq.s32.totalorder %s32, 0
      %p181 = por %p179, %p180
      %s182 = ssub.s32 %s34, %s41
      %p183 = scmp.eq.s32.totalorder %s182, 0
      %s185 = sadd.s32 %s184, 1
      %s186 = scalar_select %p183, %s184, %s185
      %p189 = pneg %p183
      %p190 = scmp.eq.s32.totalorder %s26, 3
      %p191 = por %p189, %p190
      %p192 = scmp.ne.s32.totalorder %s184, %s187
      %p193 = scmp.eq.s32.totalorder %s26, 0
      %p194 = por %p192, %p193
      %p195 = scmp.ne.s32.totalorder %s184, %s187
      %p196 = scmp.eq.s32.totalorder %s31, 3
      %p197 = por %p195, %p196
      %p198 = scmp.ne.s32.totalorder %s187, %s188
      %p199 = scmp.eq.s32.totalorder %s31, 0
      %p200 = por %p198, %p199
      %p201 = scmp.ne.s32.totalorder %s187, %s188
      %p202 = scmp.eq.s32.totalorder %s32, 3
      %p203 = por %p201, %p202
      %p205 = scmp.ne.s32.totalorder %s188, %s204
      %p206 = scmp.eq.s32.totalorder %s32, 0
      %p207 = por %p205, %p206
      %s208 = ssub.s32 %s34, %s41
      %p209 = scmp.eq.s32.totalorder %s208, 0
      %s211 = sadd.s32 %s210, 1
      %s212 = scalar_select %p209, %s210, %s211
      %p215 = pneg %p209
      %p216 = scmp.eq.s32.totalorder %s26, 3
      %p217 = por %p215, %p216
      %p218 = scmp.ne.s32.totalorder %s210, %s213
      %p219 = scmp.eq.s32.totalorder %s26, 0
      %p220 = por %p218, %p219
      %p221 = scmp.ne.s32.totalorder %s210, %s213
      %p222 = scmp.eq.s32.totalorder %s31, 3
      %p223 = por %p221, %p222
      %p224 = scmp.ne.s32.totalorder %s213, %s214
      %p225 = scmp.eq.s32.totalorder %s31, 0
      %p226 = por %p224, %p225
      %p227 = scmp.ne.s32.totalorder %s213, %s214
      %p228 = scmp.eq.s32.totalorder %s32, 3
      %p229 = por %p227, %p228
      %p231 = scmp.ne.s32.totalorder %s214, %s230
      %p232 = scmp.eq.s32.totalorder %s32, 0
      %p233 = por %p231, %p232
      %s234 = ssub.s32 %s34, %s41
      %p235 = scmp.eq.s32.totalorder %s234, 0
      %s237 = sadd.s32 %s236, 1
      %s238 = scalar_select %p235, %s236, %s237
      %p241 = pneg %p235
      %p242 = scmp.eq.s32.totalorder %s26, 3
      %p243 = por %p241, %p242
      %p244 = scmp.ne.s32.totalorder %s236, %s239
      %p245 = scmp.eq.s32.totalorder %s26, 0
      %p246 = por %p244, %p245
      %p247 = scmp.ne.s32.totalorder %s236, %s239
      %p248 = scmp.eq.s32.totalorder %s31, 3
      %p249 = por %p247, %p248
      %p250 = scmp.ne.s32.totalorder %s239, %s240
      %p251 = scmp.eq.s32.totalorder %s31, 0
      %p252 = por %p250, %p251
      %p253 = scmp.ne.s32.totalorder %s239, %s240
      %p254 = scmp.eq.s32.totalorder %s32, 3
      %p255 = por %p253, %p254
      %p257 = scmp.ne.s32.totalorder %s240, %s256
      %p258 = scmp.eq.s32.totalorder %s32, 0
      %p259 = por %p257, %p258
      %s260 = ssub.s32 %s34, %s41
      %p261 = scmp.eq.s32.totalorder %s260, 0
      %s263 = sadd.s32 %s262, 1
      %s264 = scalar_select %p261, %s262, %s263
      %p267 = pneg %p261
      %p268 = scmp.eq.s32.totalorder %s26, 3
      %p269 = por %p267, %p268
      %p270 = scmp.ne.s32.totalorder %s262, %s265
      %p271 = scmp.eq.s32.totalorder %s26, 0
      %p272 = por %p270, %p271
      %p273 = scmp.ne.s32.totalorder %s262, %s265
      %p274 = scmp.eq.s32.totalorder %s31, 3
      %p275 = por %p273, %p274
      %p276 = scmp.ne.s32.totalorder %s265, %s266
      %p277 = scmp.eq.s32.totalorder %s31, 0
      %p278 = por %p276, %p277
      %p279 = scmp.ne.s32.totalorder %s265, %s266
      %p280 = scmp.eq.s32.totalorder %s32, 3
      %p281 = por %p279, %p280
      %p283 = scmp.ne.s32.totalorder %s266, %s282
      %p284 = scmp.eq.s32.totalorder %s32, 0
      %p285 = por %p283, %p284
      %s286 = ssub.s32 %s34, %s41
      %p287 = scmp.eq.s32.totalorder %s286, 0
      %s289 = sadd.s32 %s288, 1
      %s290 = scalar_select %p287, %s288, %s289
      %p293 = pneg %p287
      %p294 = scmp.eq.s32.totalorder %s26, 3
      %p295 = por %p293, %p294
      %p296 = scmp.ne.s32.totalorder %s288, %s291
      %p297 = scmp.eq.s32.totalorder %s26, 0
      %p298 = por %p296, %p297
      %p299 = scmp.ne.s32.totalorder %s288, %s291
      %p300 = scmp.eq.s32.totalorder %s31, 3
      %p301 = por %p299, %p300
      %p302 = scmp.ne.s32.totalorder %s291, %s292
      %p303 = scmp.eq.s32.totalorder %s31, 0
      %p304 = por %p302, %p303
      %p305 = scmp.ne.s32.totalorder %s291, %s292
      %p306 = scmp.eq.s32.totalorder %s32, 3
      %p307 = por %p305, %p306
      %p309 = scmp.ne.s32.totalorder %s292, %s308
      %p310 = scmp.eq.s32.totalorder %s32, 0
      %p311 = por %p309, %p310
      %s312 = ssub.s32 %s34, %s41
      %p313 = scmp.eq.s32.totalorder %s312, 0
      %s315 = sadd.s32 %s314, 1
      %s316 = scalar_select %p313, %s314, %s315
      %p319 = pneg %p313
      %p320 = scmp.eq.s32.totalorder %s26, 3
      %p321 = por %p319, %p320
      %p322 = scmp.ne.s32.totalorder %s314, %s317
      %p323 = scmp.eq.s32.totalorder %s26, 0
      %p324 = por %p322, %p323
      %p325 = scmp.ne.s32.totalorder %s314, %s317
      %p326 = scmp.eq.s32.totalorder %s31, 3
      %p327 = por %p325, %p326
      %p328 = scmp.ne.s32.totalorder %s317, %s318
      %p329 = scmp.eq.s32.totalorder %s31, 0
      %p330 = por %p328, %p329
      %p331 = scmp.ne.s32.totalorder %s317, %s318
      %p332 = scmp.eq.s32.totalorder %s32, 3
      %p333 = por %p331, %p332
      %p335 = scmp.ne.s32.totalorder %s318, %s334
      %p336 = scmp.eq.s32.totalorder %s32, 0
      %p337 = por %p335, %p336
      %s338 = ssub.s32 %s34, %s41
      %p339 = scmp.eq.s32.totalorder %s338, 0
      %s341 = sadd.s32 %s340, 1
      %s342 = scalar_select %p339, %s340, %s341
      %p345 = pneg %p339
      %p346 = scmp.eq.s32.totalorder %s26, 3
      %p347 = por %p345, %p346
      %p348 = scmp.ne.s32.totalorder %s340, %s343
      %p349 = scmp.eq.s32.totalorder %s26, 0
      %p350 = por %p348, %p349
      %p351 = scmp.ne.s32.totalorder %s340, %s343
      %p352 = scmp.eq.s32.totalorder %s31, 3
      %p353 = por %p351, %p352
      %p354 = scmp.ne.s32.totalorder %s343, %s344
      %p355 = scmp.eq.s32.totalorder %s31, 0
      %p356 = por %p354, %p355
      %p357 = scmp.ne.s32.totalorder %s343, %s344
      %p358 = scmp.eq.s32.totalorder %s32, 3
      %p359 = por %p357, %p358
      %p361 = scmp.ne.s32.totalorder %s344, %s360
      %p362 = scmp.eq.s32.totalorder %s32, 0
      %p363 = por %p361, %p362
      %s364 = ssub.s32 %s34, %s41
      %p365 = scmp.eq.s32.totalorder %s364, 0
      %s367 = sadd.s32 %s366, 1
      %s368 = scalar_select %p365, %s366, %s367
      %p371 = pneg %p365
      %p372 = scmp.eq.s32.totalorder %s26, 3
      %p373 = por %p371, %p372
      %p374 = scmp.ne.s32.totalorder %s366, %s369
      %p375 = scmp.eq.s32.totalorder %s26, 0
      %p376 = por %p374, %p375
      %p377 = scmp.ne.s32.totalorder %s366, %s369
      %p378 = scmp.eq.s32.totalorder %s31, 3
      %p379 = por %p377, %p378
      %p380 = scmp.ne.s32.totalorder %s369, %s370
      %p381 = scmp.eq.s32.totalorder %s31, 0
      %p382 = por %p380, %p381
      %p383 = scmp.ne.s32.totalorder %s369, %s370
      %p384 = scmp.eq.s32.totalorder %s32, 3
      %p385 = por %p383, %p384
      %p387 = scmp.ne.s32.totalorder %s370, %s386
      %p388 = scmp.eq.s32.totalorder %s32, 0
      %p389 = por %p387, %p388
      %s390 = ssub.s32 %s34, %s41
      %p391 = scmp.eq.s32.totalorder %s390, 0
      %s393 = sadd.s32 %s392, 1
      %s394 = scalar_select %p391, %s392, %s393
      %p397 = pneg %p391
      %p398 = scmp.eq.s32.totalorder %s26, 3
      %p399 = por %p397, %p398
      %p400 = scmp.ne.s32.totalorder %s392, %s395
      %p401 = scmp.eq.s32.totalorder %s26, 0
      %p402 = por %p400, %p401
      %p403 = scmp.ne.s32.totalorder %s392, %s395
      %p404 = scmp.eq.s32.totalorder %s31, 3
      %p405 = por %p403, %p404
      %p406 = scmp.ne.s32.totalorder %s395, %s396
      %p407 = scmp.eq.s32.totalorder %s31, 0
      %p408 = por %p406, %p407
      %p409 = scmp.ne.s32.totalorder %s395, %s396
      %p410 = scmp.eq.s32.totalorder %s32, 3
      %p411 = por %p409, %p410
      %p413 = scmp.ne.s32.totalorder %s396, %s412
      %p414 = scmp.eq.s32.totalorder %s32, 0
      %p415 = por %p413, %p414
      %s416 = ssub.s32 %s34, %s41
      %p417 = scmp.eq.s32.totalorder %s416, 0
      %s419 = sadd.s32 %s418, 1
      %s420 = scalar_select %p417, %s418, %s419
      %p423 = pneg %p417
      %p424 = scmp.eq.s32.totalorder %s26, 3
      %p425 = por %p423, %p424
      %p426 = scmp.ne.s32.totalorder %s418, %s421
      %p427 = scmp.eq.s32.totalorder %s26, 0
      %p428 = por %p426, %p427
      %p429 = scmp.ne.s32.totalorder %s418, %s421
      %p430 = scmp.eq.s32.totalorder %s31, 3
      %p431 = por %p429, %p430
      %p432 = scmp.ne.s32.totalorder %s421, %s422
      %p433 = scmp.eq.s32.totalorder %s31, 0
      %p434 = por %p432, %p433
      %p435 = scmp.ne.s32.totalorder %s421, %s422
      %p436 = scmp.eq.s32.totalorder %s32, 3
      %p437 = por %p435, %p436
      %p439 = scmp.ne.s32.totalorder %s422, %s438
      %p440 = scmp.eq.s32.totalorder %s32, 0
      %p441 = por %p439, %p440
      %s442 = ssub.s32 %s34, %s41
      %p443 = scmp.eq.s32.totalorder %s442, 0
      %s445 = sadd.s32 %s444, 1
      %s446 = scalar_select %p443, %s444, %s445
      %p449 = pneg %p443
      %p450 = scmp.eq.s32.totalorder %s26, 3
      %p451 = por %p449, %p450
      %p452 = scmp.ne.s32.totalorder %s444, %s447
      %p453 = scmp.eq.s32.totalorder %s26, 0
      %p454 = por %p452, %p453
      %p455 = scmp.ne.s32.totalorder %s444, %s447
      %p456 = scmp.eq.s32.totalorder %s31, 3
      %p457 = por %p455, %p456
      %p458 = scmp.ne.s32.totalorder %s447, %s448
      %p459 = scmp.eq.s32.totalorder %s31, 0
      %p460 = por %p458, %p459
      %p461 = scmp.ne.s32.totalorder %s447, %s448
      %p462 = scmp.eq.s32.totalorder %s32, 3
      %p463 = por %p461, %p462
      %p465 = scmp.ne.s32.totalorder %s448, %s464
      %p466 = scmp.eq.s32.totalorder %s32, 0
      %p467 = por %p465, %p466
      %s468 = ssub.s32 %s33, %s45
      %p469 = scmp.eq.s32.totalorder %s468, 0
      %s471 = sadd.s32 %s470, 1
      %s472 = scalar_select %p469, %s470, %s471
      %p475 = pneg %p469
      %p476 = scmp.eq.s32.totalorder %s26, 3
      %p477 = por %p475, %p476
      %p478 = scmp.ne.s32.totalorder %s470, %s473
      %p479 = scmp.eq.s32.totalorder %s26, 0
      %p480 = por %p478, %p479
      %p481 = scmp.ne.s32.totalorder %s470, %s473
      %p482 = scmp.eq.s32.totalorder %s31, 3
      %p483 = por %p481, %p482
      %p484 = scmp.ne.s32.totalorder %s473, %s474
      %p485 = scmp.eq.s32.totalorder %s31, 0
      %p486 = por %p484, %p485
      %p487 = scmp.ne.s32.totalorder %s473, %s474
      %p488 = scmp.eq.s32.totalorder %s32, 3
      %p489 = por %p487, %p488
      %p491 = scmp.ne.s32.totalorder %s474, %s490
      %p492 = scmp.eq.s32.totalorder %s32, 0
      %p493 = por %p491, %p492
      %p494 = scmp.le.s32.totalorder 1, %s26
      %p495 = scmp.lt.s32.totalorder %s26, 5
      %p496 = pnand %p494, %p495
      %p497 = pneg %p496
      // Predicated region
      $region9: #{tpu_custom_call.1} parent=5 // pred_check
        _
      $region10: #{tpu_custom_call.1} parent=5 // pred_check_branch
        %499 = sbr.rel (%p496) target = $region12
      $region11: #{tpu_custom_call.1} parent=5 // pred_region
        %s500 = ssub.s32 %s26, 1
        // Predicated region
        $region13: #{tpu_custom_call.1} parent=11 // pred_check
          %p501 = pneg %p85
        $region14: #{tpu_custom_call.1} parent=11 // pred_check_branch
          %503 = sbr.rel (%p501) target = $region16
        $region15: #{tpu_custom_call.1} parent=11 // pred_region
          _
        $region16: #{tpu_custom_call.1} parent=11 // pred_fallthru
          _
        // Predicated region
        $region17: #{tpu_custom_call.1} parent=11 // pred_check
          %p504 = pneg %p106
        $region18: #{tpu_custom_call.1} parent=11 // pred_check_branch
          %506 = sbr.rel (%p504) target = $region20
        $region19: #{tpu_custom_call.1} parent=11 // pred_region
          _
        $region20: #{tpu_custom_call.1} parent=11 // pred_fallthru
          _
        // Predicated region
        $region21: #{tpu_custom_call.1} parent=11 // pred_check
          %p507 = pneg %p127
        $region22: #{tpu_custom_call.1} parent=11 // pred_check_branch
          %509 = sbr.rel (%p507) target = $region24
        $region23: #{tpu_custom_call.1} parent=11 // pred_region
          _
        $region24: #{tpu_custom_call.1} parent=11 // pred_fallthru
          _
        // Predicated region
        $region25: #{tpu_custom_call.1} parent=11 // pred_check
          %p510 = pneg %p148
        $region26: #{tpu_custom_call.1} parent=11 // pred_check_branch
          %512 = sbr.rel (%p510) target = $region28
        $region27: #{tpu_custom_call.1} parent=11 // pred_region
          _
        $region28: #{tpu_custom_call.1} parent=11 // pred_fallthru
          _
      $region12: #{tpu_custom_call.1} parent=5 // pred_fallthru
        _
      %p513 = scmp.lt.s32.totalorder %s26, 4
      // Predicated region
      $region29: #{tpu_custom_call.1} parent=5 // pred_check
        %p514 = pneg %p513
      $region30: #{tpu_custom_call.1} parent=5 // pred_check_branch
        %516 = sbr.rel (%p514) target = $region32
      $region31: #{tpu_custom_call.1} parent=5 // pred_region
        // Predicated region
        $region33: #{tpu_custom_call.1} parent=31 // pred_check
          %p517 = pneg %p58
        $region34: #{tpu_custom_call.1} parent=31 // pred_check_branch
          %519 = sbr.rel (%p517) target = $region36
        $region35: #{tpu_custom_call.1} parent=31 // pred_region
          %p520 = scmp.lt.s32.totalorder %s33, 1
          %s521 = scalar_select %p520, %s33, 1
          %s522 = smul.addr %s521, 8
          %s523 = scalar_lea.vmem %s0, %s522
        $region36: #{tpu_custom_call.1} parent=31 // pred_fallthru
          _
        // Predicated region
        $region37: #{tpu_custom_call.1} parent=31 // pred_check
          %p524 = pneg %p168
        $region38: #{tpu_custom_call.1} parent=31 // pred_check_branch
          %526 = sbr.rel (%p524) target = $region40
        $region39: #{tpu_custom_call.1} parent=31 // pred_region
          %p527 = scmp.lt.s32.totalorder %s34, 1
          %s528 = scalar_select %p527, %s34, 1
          %s529 = smul.addr %s528, 4
          %s530 = smul.addr %s529, 4
          %s531 = scalar_lea.vmem %s5, %s530
        $region40: #{tpu_custom_call.1} parent=31 // pred_fallthru
          _
        // Predicated region
        $region41: #{tpu_custom_call.1} parent=31 // pred_check
          %p532 = pneg %p194
        $region42: #{tpu_custom_call.1} parent=31 // pred_check_branch
          %534 = sbr.rel (%p532) target = $region44
        $region43: #{tpu_custom_call.1} parent=31 // pred_region
          %p535 = scmp.lt.s32.totalorder %s34, 1
          %s536 = scalar_select %p535, %s34, 1
          %s537 = scalar_lea.vmem %s6, %s536
        $region44: #{tpu_custom_call.1} parent=31 // pred_fallthru
          _
        // Predicated region
        $region45: #{tpu_custom_call.1} parent=31 // pred_check
          %p538 = pneg %p220
        $region46: #{tpu_custom_call.1} parent=31 // pred_check_branch
          %540 = sbr.rel (%p538) target = $region48
        $region47: #{tpu_custom_call.1} parent=31 // pred_region
          %p541 = scmp.lt.s32.totalorder %s34, 1
          %s542 = scalar_select %p541, %s34, 1
          %s543 = smul.addr %s542, 4
          %s544 = smul.addr %s543, 4
          %s545 = scalar_lea.vmem %s7, %s544
        $region48: #{tpu_custom_call.1} parent=31 // pred_fallthru
          _
        // Predicated region
        $region49: #{tpu_custom_call.1} parent=31 // pred_check
          %p546 = pneg %p246
        $region50: #{tpu_custom_call.1} parent=31 // pred_check_branch
          %548 = sbr.rel (%p546) target = $region52
        $region51: #{tpu_custom_call.1} parent=31 // pred_region
          %p549 = scmp.lt.s32.totalorder %s34, 1
          %s550 = scalar_select %p549, %s34, 1
          %s551 = scalar_lea.vmem %s8, %s550
        $region52: #{tpu_custom_call.1} parent=31 // pred_fallthru
          _
        // Predicated region
        $region53: #{tpu_custom_call.1} parent=31 // pred_check
          %p552 = pneg %p272
        $region54: #{tpu_custom_call.1} parent=31 // pred_check_branch
          %554 = sbr.rel (%p552) target = $region56
        $region55: #{tpu_custom_call.1} parent=31 // pred_region
          %p555 = scmp.lt.s32.totalorder %s34, 1
          %s556 = scalar_select %p555, %s34, 1
          %s557 = scalar_lea.vmem %s9, %s556
        $region56: #{tpu_custom_call.1} parent=31 // pred_fallthru
          _
        // Predicated region
        $region57: #{tpu_custom_call.1} parent=31 // pred_check
          %p558 = pneg %p298
        $region58: #{tpu_custom_call.1} parent=31 // pred_check_branch
          %560 = sbr.rel (%p558) target = $region60
        $region59: #{tpu_custom_call.1} parent=31 // pred_region
          %p561 = scmp.lt.s32.totalorder %s34, 1
          %s562 = scalar_select %p561, %s34, 1
          %s563 = scalar_lea.vmem %s10, %s562
        $region60: #{tpu_custom_call.1} parent=31 // pred_fallthru
          _
        // Predicated region
        $region61: #{tpu_custom_call.1} parent=31 // pred_check
          %p564 = pneg %p324
        $region62: #{tpu_custom_call.1} parent=31 // pred_check_branch
          %566 = sbr.rel (%p564) target = $region64
        $region63: #{tpu_custom_call.1} parent=31 // pred_region
          %p567 = scmp.lt.s32.totalorder %s34, 1
          %s568 = scalar_select %p567, %s34, 1
          %s569 = smul.addr %s568, 4
          %s570 = smul.addr %s569, 4
          %s571 = scalar_lea.vmem %s11, %s570
        $region64: #{tpu_custom_call.1} parent=31 // pred_fallthru
          _
        // Predicated region
        $region65: #{tpu_custom_call.1} parent=31 // pred_check
          %p572 = pneg %p350
        $region66: #{tpu_custom_call.1} parent=31 // pred_check_branch
          %574 = sbr.rel (%p572) target = $region68
        $region67: #{tpu_custom_call.1} parent=31 // pred_region
          %p575 = scmp.lt.s32.totalorder %s34, 1
          %s576 = scalar_select %p575, %s34, 1
          %s577 = scalar_lea.vmem %s12, %s576
        $region68: #{tpu_custom_call.1} parent=31 // pred_fallthru
          _
        // Predicated region
        $region69: #{tpu_custom_call.1} parent=31 // pred_check
          %p578 = pneg %p376
        $region70: #{tpu_custom_call.1} parent=31 // pred_check_branch
          %580 = sbr.rel (%p578) target = $region72
        $region71: #{tpu_custom_call.1} parent=31 // pred_region
          %p581 = scmp.lt.s32.totalorder %s34, 1
          %s582 = scalar_select %p581, %s34, 1
          %s583 = smul.addr %s582, 16
          %s584 = smul.addr %s583, 4
          %s585 = scalar_lea.vmem %s13, %s584
        $region72: #{tpu_custom_call.1} parent=31 // pred_fallthru
          _
        // Predicated region
        $region73: #{tpu_custom_call.1} parent=31 // pred_check
          %p586 = pneg %p402
        $region74: #{tpu_custom_call.1} parent=31 // pred_check_branch
          %588 = sbr.rel (%p586) target = $region76
        $region75: #{tpu_custom_call.1} parent=31 // pred_region
          %p589 = scmp.lt.s32.totalorder %s34, 1
          %s590 = scalar_select %p589, %s34, 1
          %s591 = scalar_lea.vmem %s14, %s590
        $region76: #{tpu_custom_call.1} parent=31 // pred_fallthru
          _
        // Predicated region
        $region77: #{tpu_custom_call.1} parent=31 // pred_check
          %p592 = pneg %p428
        $region78: #{tpu_custom_call.1} parent=31 // pred_check_branch
          %594 = sbr.rel (%p592) target = $region80
        $region79: #{tpu_custom_call.1} parent=31 // pred_region
          %p595 = scmp.lt.s32.totalorder %s34, 1
          %s596 = scalar_select %p595, %s34, 1
          %s597 = scalar_lea.vmem %s15, %s596
        $region80: #{tpu_custom_call.1} parent=31 // pred_fallthru
          _
        // Predicated region
        $region81: #{tpu_custom_call.1} parent=31 // pred_check
          %p598 = pneg %p454
        $region82: #{tpu_custom_call.1} parent=31 // pred_check_branch
          %600 = sbr.rel (%p598) target = $region84
        $region83: #{tpu_custom_call.1} parent=31 // pred_region
          %p601 = scmp.lt.s32.totalorder %s34, 1
          %s602 = scalar_select %p601, %s34, 1
          %s603 = scalar_lea.vmem %s16, %s602
        $region84: #{tpu_custom_call.1} parent=31 // pred_fallthru
          _
      $region32: #{tpu_custom_call.1} parent=5 // pred_fallthru
        _
      %p604 = scmp.le.s32.totalorder 1, %s26
      %p605 = scmp.lt.s32.totalorder %s26, 5
      %p606 = pnand %p604, %p605
      %p607 = pneg %p606
      // Predicated region
      $region85: #{tpu_custom_call.1} parent=5 // pred_check
        _
      $region86: #{tpu_custom_call.1} parent=5 // pred_check_branch
        %609 = sbr.rel (%p606) target = $region88
      $region87: #{tpu_custom_call.1} parent=5 // pred_region
        %s610 = ssub.s32 %s26, 1
        %p611 = scmp.lt.s32.totalorder %s35, 1
        %s612 = scalar_select %p611, %s35, 1
        %s613 = smul.addr %s612, 8
        %s614 = scalar_lea.vmem %s0, %s613
        %p615 = pneg %p64
        %p616 = pneg %p61
        %p617 = pneg %p85
        %p618 = pneg %p82
        %p619 = pneg %p106
        %p620 = pneg %p103
        %p621 = pneg %p127
        %p622 = pneg %p124
        %p623 = pneg %p148
        %p624 = pneg %p145
        %p625 = scmp.lt.s32.totalorder %s36, 1
        %s626 = scalar_select %p625, %s36, 1
        %s627 = smul.addr %s626, 4
        %s628 = smul.addr %s627, 4
        %s629 = scalar_lea.vmem %s5, %s628
        %p630 = pneg %p174
        %p631 = pneg %p171
        %p632 = scmp.lt.s32.totalorder %s36, 1
        %s633 = scalar_select %p632, %s36, 1
        %s634 = scalar_lea.vmem %s6, %s633
        %p635 = pneg %p200
        %p636 = pneg %p197
        %p637 = scmp.lt.s32.totalorder %s36, 1
        %s638 = scalar_select %p637, %s36, 1
        %s639 = smul.addr %s638, 4
        %s640 = smul.addr %s639, 4
        %s641 = scalar_lea.vmem %s7, %s640
        %p642 = pneg %p226
        %p643 = pneg %p223
        %p644 = scmp.lt.s32.totalorder %s36, 1
        %s645 = scalar_select %p644, %s36, 1
        %s646 = scalar_lea.vmem %s8, %s645
        %p647 = pneg %p252
        %p648 = pneg %p249
        %p649 = scmp.lt.s32.totalorder %s36, 1
        %s650 = scalar_select %p649, %s36, 1
        %s651 = scalar_lea.vmem %s9, %s650
        %p652 = pneg %p278
        %p653 = pneg %p275
        %p654 = scmp.lt.s32.totalorder %s36, 1
        %s655 = scalar_select %p654, %s36, 1
        %s656 = scalar_lea.vmem %s10, %s655
        %p657 = pneg %p304
        %p658 = pneg %p301
        %p659 = scmp.lt.s32.totalorder %s36, 1
        %s660 = scalar_select %p659, %s36, 1
        %s661 = smul.addr %s660, 4
        %s662 = smul.addr %s661, 4
        %s663 = scalar_lea.vmem %s11, %s662
        %p664 = pneg %p330
        %p665 = pneg %p327
        %p666 = scmp.lt.s32.totalorder %s36, 1
        %s667 = scalar_select %p666, %s36, 1
        %s668 = scalar_lea.vmem %s12, %s667
        %p669 = pneg %p356
        %p670 = pneg %p353
        %p671 = scmp.lt.s32.totalorder %s36, 1
        %s672 = scalar_select %p671, %s36, 1
        %s673 = smul.addr %s672, 16
        %s674 = smul.addr %s673, 4
        %s675 = scalar_lea.vmem %s13, %s674
        %p676 = pneg %p382
        %p677 = pneg %p379
        %p678 = scmp.lt.s32.totalorder %s36, 1
        %s679 = scalar_select %p678, %s36, 1
        %s680 = scalar_lea.vmem %s14, %s679
        %p681 = pneg %p408
        %p682 = pneg %p405
        %p683 = scmp.lt.s32.totalorder %s36, 1
        %s684 = scalar_select %p683, %s36, 1
        %s685 = scalar_lea.vmem %s15, %s684
        %p686 = pneg %p434
        %p687 = pneg %p431
        %p688 = scmp.lt.s32.totalorder %s36, 1
        %s689 = scalar_select %p688, %s36, 1
        %s690 = scalar_lea.vmem %s16, %s689
        %p691 = pneg %p460
        %p692 = pneg %p457
        %p693 = pneg %p486
        %p694 = pneg %p483
        %s695 = sand.u32 %s473, 1
        %s696 = scalar_lea.sflag [#allocation4], %s695
        %s697 = sand.u32 %s473, 1
        %s698 = scalar_lea.vmem [#allocation3], %s697
        %p699 = scmp.lt.s32.totalorder %s35, 1
        %s700 = scalar_select %p699, %s35, 1
        %s701 = smul.addr %s700, 8
        %s702 = scalar_lea.vmem %s0, %s701
        %p703 = scmp.lt.s32.totalorder %s36, 1
        %s704 = scalar_select %p703, %s36, 1
        %s705 = smul.addr %s704, 4
        %s706 = smul.addr %s705, 4
        %s707 = scalar_lea.vmem %s5, %s706
        %p708 = scmp.lt.s32.totalorder %s36, 1
        %s709 = scalar_select %p708, %s36, 1
        %s710 = scalar_lea.vmem %s6, %s709
        %p711 = scmp.lt.s32.totalorder %s36, 1
        %s712 = scalar_select %p711, %s36, 1
        %s713 = smul.addr %s712, 4
        %s714 = smul.addr %s713, 4
        %s715 = scalar_lea.vmem %s7, %s714
        %p716 = scmp.lt.s32.totalorder %s36, 1
        %s717 = scalar_select %p716, %s36, 1
        %s718 = scalar_lea.vmem %s8, %s717
        %p719 = scmp.lt.s32.totalorder %s36, 1
        %s720 = scalar_select %p719, %s36, 1
        %s721 = scalar_lea.vmem %s9, %s720
        %p722 = scmp.lt.s32.totalorder %s36, 1
        %s723 = scalar_select %p722, %s36, 1
        %s724 = scalar_lea.vmem %s10, %s723
        %p725 = scmp.lt.s32.totalorder %s36, 1
        %s726 = scalar_select %p725, %s36, 1
        %s727 = smul.addr %s726, 4
        %s728 = smul.addr %s727, 4
        %s729 = scalar_lea.vmem %s11, %s728
        %p730 = scmp.lt.s32.totalorder %s36, 1
        %s731 = scalar_select %p730, %s36, 1
        %s732 = scalar_lea.vmem %s12, %s731
        %p733 = scmp.lt.s32.totalorder %s36, 1
        %s734 = scalar_select %p733, %s36, 1
        %s735 = smul.addr %s734, 16
        %s736 = smul.addr %s735, 4
        %s737 = scalar_lea.vmem %s13, %s736
        %p738 = scmp.lt.s32.totalorder %s36, 1
        %s739 = scalar_select %p738, %s36, 1
        %s740 = scalar_lea.vmem %s14, %s739
        %p741 = scmp.lt.s32.totalorder %s36, 1
        %s742 = scalar_select %p741, %s36, 1
        %s743 = scalar_lea.vmem %s15, %s742
        %p744 = scmp.lt.s32.totalorder %s36, 1
        %s745 = scalar_select %p744, %s36, 1
        %s746 = scalar_lea.vmem %s16, %s745
        %p748 = scmp.eq.s32.totalorder %s36, 0
        // Predicated region
        $region89: #{tpu_custom_call.1} parent=87 // pred_check
          %p749 = pneg %p748
        $region90: #{tpu_custom_call.1} parent=87 // pred_check_branch
          %751 = sbr.rel (%p749) target = $region92
        $region91: #{tpu_custom_call.1} parent=87 // pred_region
          %v752 = vld [vmem:[%s702] sm:$0xff]
          %v753 = vld [vmem:[%s2] sm:$0x1]
          %v754 = vld [vmem:[%s3] sm:$0xff]
          %v756 = vlaneseq
          %v757 = vshrl.u32 %v756, 7
          %v758 = vsub.s32 0, %v757
          %v759 = vrot.slane %v753, %v758
          %v761 = vadd.f32 %v759, %v754
          %v762 = vld [vmem:[%s1] sm:$0x1]
          %764 = vset.pattern.permute.xlu0 0
          %765 = vperm.xlu0 %764, %v752
          %v766 = vpop.permute.xlu0 %765
          %v768 = vlaneseq
          %v769 = vshrl.u32 %v768, 7
          %v770 = vsub.s32 0, %v769
          %v771 = vrot.slane %v762, %v770
          %v772 = vmul.f32 %v766, %v771
          %v773 = vadd.f32 %v761, %v772
          %v774 = vld [vmem:[%s1 + $0x1] sm:$0x1]
          %775 = vset.pattern.permute.xlu0 1
          %776 = vperm.xlu0 %775, %v752
          %v777 = vpop.permute.xlu0 %776
          %v779 = vlaneseq
          %v780 = vshrl.u32 %v779, 7
          %v781 = vsub.s32 0, %v780
          %v782 = vrot.slane %v774, %v781
          %v783 = vmul.f32 %v777, %v782
          %v784 = vadd.f32 %v773, %v783
          %v785 = vld [vmem:[%s1 + $0x2] sm:$0x1]
          %786 = vset.pattern.permute.xlu0 2
          %787 = vperm.xlu0 %786, %v752
          %v788 = vpop.permute.xlu0 %787
          %v790 = vlaneseq
          %v791 = vshrl.u32 %v790, 7
          %v792 = vsub.s32 0, %v791
          %v793 = vrot.slane %v785, %v792
          %v794 = vmul.f32 %v788, %v793
          %v795 = vadd.f32 %v784, %v794
          %v796 = vld [vmem:[%s4] sm:$0x1]
          %vm797 = vcmask 253952
          %798 = vst.msk [vmem:[#allocation2] sm:$0x1] %vm797, %v796
          %vm799 = vcmask 261120
          %800 = vst.msk [vmem:[#allocation2 + $0x1] sm:$0xff] %vm799, %v795
        $region92: #{tpu_custom_call.1} parent=87 // pred_fallthru
          _
        %v801 = vld [vmem:[#allocation2] sm:$0xff]
        %v802 = vld [vmem:[#allocation2 + $0x8] sm:$0x1]
        %v803 = vld [vmem:[%s721] sm:$0x1]
        %v804 = vld [vmem:[%s724] sm:$0x1]
        %vm805 = vcmask 261120
        %v806 = vsel %vm805, %v801, 0.0
        %807 = vadd.xlane.f32.xlu0 %v806
        %v808 = vpop.xlane.xlu0 %807
        %vm809 = vcmask 253952
        %v810 = vsel %vm809, %v802, 0.0
        %811 = vadd.xlane.f32.xlu0 %v810
        %v812 = vpop.xlane.xlu0 %811
        %v813 = vrcp.pop 32.0
        %v814 = vmul.f32 %v808, %v813
        %v815 = vmul.f32 %v812, %v813
        %v816 = vsub.f32 %v801, %v814
        %v817 = vsub.f32 %v802, %v815
        %v818 = vmul.f32 %v816, %v816
        %v819 = vmul.f32 %v817, %v817
        %v820 = vsel %vm805, %v818, 0.0
        %821 = vadd.xlane.f32.xlu0 %v820
        %v822 = vpop.xlane.xlu0 %821
        %v823 = vsel %vm809, %v819, 0.0
        %824 = vadd.xlane.f32.xlu0 %v823
        %v825 = vpop.xlane.xlu0 %824
        %v826 = vmul.f32 %v822, %v813
        %v827 = vmul.f32 %v825, %v813
        %v828 = vadd.f32 %v826, 1e-06
        %v829 = vadd.f32 %v827, 1e-06
        %v830 = vrsqrt.pop %v828
        %v831 = vrsqrt.pop %v829
        %v832 = vmul.f32 %v816, %v830
        %v833 = vmul.f32 %v817, %v831
        %v835 = vlaneseq
        %v836 = vshrl.u32 %v835, 7
        %v837 = vsub.s32 0, %v836
        %v838 = vrot.slane %v803, %v837
        %v840 = vmul.f32 %v832, %v838
        %v841 = vmul.f32 %v833, %v838
        %v843 = vlaneseq
        %v844 = vshrl.u32 %v843, 7
        %v845 = vsub.s32 0, %v844
        %v846 = vrot.slane %v804, %v845
        %v848 = vadd.f32 %v840, %v846
        %v849 = vadd.f32 %v841, %v846
        %v850 = vpack.c.bf16 %v849, %v848
        %v851 = vld [vmem:[%s707] sm:$0xf]
        %v852 = vld [vmem:[%s707 + $0x4] sm:$0xf]
        %v853 = vld [vmem:[%s707 + $0x8] sm:$0xf]
        %v854 = vld [vmem:[%s707 + $0xc] sm:$0xf]
        %v855 = vld [vmem:[%s710] sm:$0x1]
        %v857 = vlaneseq
        %v858 = vshrl.u32 %v857, 7
        %v859 = vsub.s32 0, %v858
        %v860 = vrot.slane %v855, %v859
        %v866 = vunpack.c.l.b16 %v851
        %v867 = vunpack.c.l.b16 %v852
        %v868 = vunpack.c.l.b16 %v853
        %v869 = vunpack.c.l.b16 %v854
        %v870 = vpack.c.b16 %v867, %v866
        %v871 = vpack.c.b16 %v869, %v868
        %v875 = vsel %vm805, %v850, 0
        %877 = vmatprep.subr.bf16.mxu0 0
        %878 = vmatpush1.bf16.msra.mxu0 %v870
        %879 = vmatprep.subr.bf16.mxu0 0
        %880 = vmatpush1.bf16.msra.mxu0 %v871
        %881 = vmatprep.subr.bf16.mxu0 0
        %882 = vmatpush1.bf16.msra.mxu0 0
        %883 = vmatprep.subr.bf16.mxu0 0
        %884 = vmatpush1.bf16.msra.mxu0 0
        %885 = vmatprep.subr.bf16.mxu0 0
        %886 = vmatpush1.bf16.msra.mxu0 0
        %887 = vmatprep.subr.bf16.mxu0 0
        %888 = vmatpush1.bf16.msra.mxu0 0
        %889 = vmatprep.subr.bf16.mxu0 0
        %890 = vmatpush1.bf16.msra.mxu0 0
        %891 = vmatprep.subr.bf16.mxu0 0
        %892 = vmatpush1.bf16.msra.mxu0 0
        %893 = vmatprep.subr.bf16.mxu0 0
        %894 = vmatpush1.bf16.msra.mxu0 0
        %895 = vmatprep.subr.bf16.mxu0 0
        %896 = vmatpush1.bf16.msra.mxu0 0
        %897 = vmatprep.subr.bf16.mxu0 0
        %898 = vmatpush1.bf16.msra.mxu0 0
        %899 = vmatprep.subr.bf16.mxu0 0
        %900 = vmatpush1.bf16.msra.mxu0 0
        %901 = vmatprep.subr.bf16.mxu0 0
        %902 = vmatpush1.bf16.msra.mxu0 0
        %903 = vmatprep.subr.bf16.mxu0 0
        %904 = vmatpush1.bf16.msra.mxu0 0
        %905 = vmatprep.subr.bf16.mxu0 0
        %906 = vmatpush1.bf16.msra.mxu0 0
        %907 = vmatprep.subr.bf16.mxu0 0
        %908 = vmatpush1.bf16.msra.mxu0 0
        %909 = vmatprep.mubr.bf16.mxu0 0
        %910 = vmatmul.mubr.bf16.gmra.mrb[0].mxu0 %v875
        %v911 = vpop.f32.mrb[0].mxu0
        %v912 = vadd.f32 %v860, %v911
        %v913 = vpop.f32.mrb[0].mxu0
        %v914 = vpop.f32.mrb[0].mxu0
        %v915 = vadd.f32 %v860, %v914
        %v916 = vpop.f32.mrb[0].mxu0
        %917 = vdwg.mxu0
        %v918 = vld [vmem:[%s715] sm:$0xf]
        %v919 = vld [vmem:[%s715 + $0x4] sm:$0xf]
        %v920 = vld [vmem:[%s715 + $0x8] sm:$0xf]
        %v921 = vld [vmem:[%s715 + $0xc] sm:$0xf]
        %v922 = vpack.c.bf16 %v915, %v912
        %924 = vrot.lane.b32.xlu0 %v922, 96
        %v925 = vpop.permute.xlu0 %924
        %vm926 = vcmask 130048
        %v928 = vsel %vm926, %v922, 0
        %v931 = vsel %vm926, %v925, 0
        %933 = vmatprep.subr.bf16.mxu0 0
        %934 = vmatpush1.bf16.xpose.msra.mxu0 %v931
        %935 = vmatprep.subr.bf16.mxu0 0
        %936 = vmatpush1.bf16.xpose.msra.mxu0 0
        %937 = vmatprep.subr.bf16.mxu0 0
        %938 = vmatpush1.bf16.xpose.msra.mxu0 0
        %939 = vmatprep.subr.bf16.mxu0 0
        %940 = vmatpush1.bf16.xpose.msra.mxu0 0
        %941 = vmatprep.subr.bf16.mxu0 0
        %942 = vmatpush1.bf16.xpose.msra.mxu0 0
        %943 = vmatprep.subr.bf16.mxu0 0
        %944 = vmatpush1.bf16.xpose.msra.mxu0 0
        %945 = vmatprep.subr.bf16.mxu0 0
        %946 = vmatpush1.bf16.xpose.msra.mxu0 0
        %947 = vmatprep.subr.bf16.mxu0 0
        %948 = vmatpush1.bf16.xpose.msra.mxu0 0
        %949 = vmatprep.subr.bf16.mxu0 0
        %950 = vmatpush1.bf16.xpose.msra.mxu0 0
        %951 = vmatprep.subr.bf16.mxu0 0
        %952 = vmatpush1.bf16.xpose.msra.mxu0 0
        %953 = vmatprep.subr.bf16.mxu0 0
        %954 = vmatpush1.bf16.xpose.msra.mxu0 0
        %955 = vmatprep.subr.bf16.mxu0 0
        %956 = vmatpush1.bf16.xpose.msra.mxu0 0
        %957 = vmatprep.subr.bf16.mxu0 0
        %958 = vmatpush1.bf16.xpose.msra.mxu0 0
        %959 = vmatprep.subr.bf16.mxu0 0
        %960 = vmatpush1.bf16.xpose.msra.mxu0 0
        %961 = vmatprep.subr.bf16.mxu0 0
        %962 = vmatpush1.bf16.xpose.msra.mxu0 0
        %963 = vmatprep.subr.bf16.mxu0 0
        %964 = vmatpush1.bf16.xpose.msra.mxu0 0
        %965 = vmatprep.mubr.bf16.mxu0 0
        %966 = vmatmul.mubr.bf16.gmra.mrb[0].mxu0 %v928
        %v967 = vpop.f32.mrb[0].mxu0
        %v968 = vadd.f32 0.0, %v967
        %v969 = vpop.f32.mrb[0].mxu0
        %v970 = vpop.f32.mrb[0].mxu0
        %v971 = vadd.f32 0.0, %v970
        %v972 = vpop.f32.mrb[0].mxu0
        %973 = vdwg.mxu0
        %v974 = vmul.f32 %v968, 0.25
        %v975 = vmul.f32 %v971, 0.25
        %vm976 = vcmask 72704
        %v977 = vsel %vm976, %v974, -inf
        %978 = vmax.xlane.f32.xlu0 %v977
        %v979 = vpop.xlane.xlu0 %978
        %vm980 = vcmask 65536
        %v981 = vsel %vm980, %v975, -inf
        %982 = vmax.xlane.f32.xlu0 %v981
        %v983 = vpop.xlane.xlu0 %982
        %v984 = vsub.f32 %v974, %v979
        %v985 = vsub.f32 %v975, %v983
        %v986 = vmul.f32 %v984, 1.442695
        %v987 = vpow.pop %v986
        %v988 = vmul.f32 %v985, 1.442695
        %v989 = vpow.pop %v988
        %v990 = vsel %vm976, %v987, 0.0
        %991 = vadd.xlane.f32.xlu0 %v990
        %v992 = vpop.xlane.xlu0 %991
        %v993 = vsel %vm980, %v989, 0.0
        %994 = vadd.xlane.f32.xlu0 %v993
        %v995 = vpop.xlane.xlu0 %994
        %v996 = vrcp.pop %v992
        %v997 = vrcp.pop %v995
        %v998 = vmul.f32 %v987, %v996
        %v999 = vmul.f32 %v989, %v997
        %v1000 = vpack.c.bf16 %v999, %v998
        %1001 = vrot.lane.b32.xlu0 %v922, 64
        %v1002 = vpop.permute.xlu0 %1001
        %v1004 = vsel %vm976, %v1000, 0
        %vm1006 = vcmask 1043456
        %vm1007 = vcmask 1044480
        %v1008 = vsel %vm1006, 4294967295, 65535
        %v1009 = vsel %vm1007, %v1008, 0
        %v1011 = vand.u32 %v1002, %v1009
        %1013 = vmatprep.subr.bf16.mxu0 0
        %1014 = vmatpush1.bf16.msra.mxu0 %v1011
        %1015 = vmatprep.subr.bf16.mxu0 0
        %1016 = vmatpush1.bf16.msra.mxu0 0
        %1017 = vmatprep.subr.bf16.mxu0 0
        %1018 = vmatpush1.bf16.msra.mxu0 0
        %1019 = vmatprep.subr.bf16.mxu0 0
        %1020 = vmatpush1.bf16.msra.mxu0 0
        %1021 = vmatprep.subr.bf16.mxu0 0
        %1022 = vmatpush1.bf16.msra.mxu0 0
        %1023 = vmatprep.subr.bf16.mxu0 0
        %1024 = vmatpush1.bf16.msra.mxu0 0
        %1025 = vmatprep.subr.bf16.mxu0 0
        %1026 = vmatpush1.bf16.msra.mxu0 0
        %1027 = vmatprep.subr.bf16.mxu0 0
        %1028 = vmatpush1.bf16.msra.mxu0 0
        %1029 = vmatprep.subr.bf16.mxu0 0
        %1030 = vmatpush1.bf16.msra.mxu0 0
        %1031 = vmatprep.subr.bf16.mxu0 0
        %1032 = vmatpush1.bf16.msra.mxu0 0
        %1033 = vmatprep.subr.bf16.mxu0 0
        %1034 = vmatpush1.bf16.msra.mxu0 0
        %1035 = vmatprep.subr.bf16.mxu0 0
        %1036 = vmatpush1.bf16.msra.mxu0 0
        %1037 = vmatprep.subr.bf16.mxu0 0
        %1038 = vmatpush1.bf16.msra.mxu0 0
        %1039 = vmatprep.subr.bf16.mxu0 0
        %1040 = vmatpush1.bf16.msra.mxu0 0
        %1041 = vmatprep.subr.bf16.mxu0 0
        %1042 = vmatpush1.bf16.msra.mxu0 0
        %1043 = vmatprep.subr.bf16.mxu0 0
        %1044 = vmatpush1.bf16.msra.mxu0 0
        %1045 = vmatprep.mubr.bf16.mxu0 0
        %1046 = vmatmul.mubr.bf16.gmra.mrb[0].mxu0 %v1004
        %v1047 = vpop.f32.mrb[0].mxu0
        %v1048 = vadd.f32 0.0, %v1047
        %v1049 = vpop.f32.mrb[0].mxu0
        %v1050 = vpop.f32.mrb[0].mxu0
        %v1051 = vadd.f32 0.0, %v1050
        %v1052 = vpop.f32.mrb[0].mxu0
        %1053 = vdwg.mxu0
        %v1054 = vpack.c.bf16 %v1051, %v1048
        %1055 = vrot.lane.b32.xlu0 %v922, 112
        %v1056 = vpop.permute.xlu0 %1055
        %1057 = vrot.lane.b32.xlu0 %v922, 80
        %v1058 = vpop.permute.xlu0 %1057
        %v1060 = vsel %vm926, %v1056, 0
        %v1063 = vsel %vm926, %v1058, 0
        %1065 = vmatprep.subr.bf16.mxu0 0
        %1066 = vmatpush1.bf16.xpose.msra.mxu0 %v1063
        %1067 = vmatprep.subr.bf16.mxu0 0
        %1068 = vmatpush1.bf16.xpose.msra.mxu0 0
        %1069 = vmatprep.subr.bf16.mxu0 0
        %1070 = vmatpush1.bf16.xpose.msra.mxu0 0
        %1071 = vmatprep.subr.bf16.mxu0 0
        %1072 = vmatpush1.bf16.xpose.msra.mxu0 0
        %1073 = vmatprep.subr.bf16.mxu0 0
        %1074 = vmatpush1.bf16.xpose.msra.mxu0 0
        %1075 = vmatprep.subr.bf16.mxu0 0
        %1076 = vmatpush1.bf16.xpose.msra.mxu0 0
        %1077 = vmatprep.subr.bf16.mxu0 0
        %1078 = vmatpush1.bf16.xpose.msra.mxu0 0
        %1079 = vmatprep.subr.bf16.mxu0 0
        %1080 = vmatpush1.bf16.xpose.msra.mxu0 0
        %1081 = vmatprep.subr.bf16.mxu0 0
        %1082 = vmatpush1.bf16.xpose.msra.mxu0 0
        %1083 = vmatprep.subr.bf16.mxu0 0
        %1084 = vmatpush1.bf16.xpose.msra.mxu0 0
        %1085 = vmatprep.subr.bf16.mxu0 0
        %1086 = vmatpush1.bf16.xpose.msra.mxu0 0
        %1087 = vmatprep.subr.bf16.mxu0 0
        %1088 = vmatpush1.bf16.xpose.msra.mxu0 0
        %1089 = vmatprep.subr.bf16.mxu0 0
        %1090 = vmatpush1.bf16.xpose.msra.mxu0 0
        %1091 = vmatprep.subr.bf16.mxu0 0
        %1092 = vmatpush1.bf16.xpose.msra.mxu0 0
        %1093 = vmatprep.subr.bf16.mxu0 0
        %1094 = vmatpush1.bf16.xpose.msra.mxu0 0
        %1095 = vmatprep.subr.bf16.mxu0 0
        %1096 = vmatpush1.bf16.xpose.msra.mxu0 0
        %1097 = vmatprep.mubr.bf16.mxu0 0
        %1098 = vmatmul.mubr.bf16.gmra.mrb[0].mxu0 %v1060
        %v1099 = vpop.f32.mrb[0].mxu0
        %v1100 = vadd.f32 0.0, %v1099
        %v1101 = vpop.f32.mrb[0].mxu0
        %v1102 = vpop.f32.mrb[0].mxu0
        %v1103 = vadd.f32 0.0, %v1102
        %v1104 = vpop.f32.mrb[0].mxu0
        %1105 = vdwg.mxu0
        %v1106 = vmul.f32 %v1100, 0.25
        %v1107 = vmul.f32 %v1103, 0.25
        %v1108 = vsel %vm976, %v1106, -inf
        %1109 = vmax.xlane.f32.xlu0 %v1108
        %v1110 = vpop.xlane.xlu0 %1109
        %v1111 = vsel %vm980, %v1107, -inf
        %1112 = vmax.xlane.f32.xlu0 %v1111
        %v1113 = vpop.xlane.xlu0 %1112
        %v1114 = vsub.f32 %v1106, %v1110
        %v1115 = vsub.f32 %v1107, %v1113
        %v1116 = vmul.f32 %v1114, 1.442695
        %v1117 = vpow.pop %v1116
        %v1118 = vmul.f32 %v1115, 1.442695
        %v1119 = vpow.pop %v1118
        %v1120 = vsel %vm976, %v1117, 0.0
        %1121 = vadd.xlane.f32.xlu0 %v1120
        %v1122 = vpop.xlane.xlu0 %1121
        %v1123 = vsel %vm980, %v1119, 0.0
        %1124 = vadd.xlane.f32.xlu0 %v1123
        %v1125 = vpop.xlane.xlu0 %1124
        %v1126 = vrcp.pop %v1122
        %v1127 = vrcp.pop %v1125
        %v1128 = vmul.f32 %v1117, %v1126
        %v1129 = vmul.f32 %v1119, %v1127
        %v1130 = vpack.c.bf16 %v1129, %v1128
        %1131 = vrot.lane.b32.xlu0 %v922, 48
        %v1132 = vpop.permute.xlu0 %1131
        %v1134 = vsel %vm976, %v1130, 0
        %v1137 = vand.u32 %v1132, %v1009
        %1139 = vmatprep.subr.bf16.mxu0 0
        %1140 = vmatpush1.bf16.msra.mxu0 %v1137
        %1141 = vmatprep.subr.bf16.mxu0 0
        %1142 = vmatpush1.bf16.msra.mxu0 0
        %1143 = vmatprep.subr.bf16.mxu0 0
        %1144 = vmatpush1.bf16.msra.mxu0 0
        %1145 = vmatprep.subr.bf16.mxu0 0
        %1146 = vmatpush1.bf16.msra.mxu0 0
        %1147 = vmatprep.subr.bf16.mxu0 0
        %1148 = vmatpush1.bf16.msra.mxu0 0
        %1149 = vmatprep.subr.bf16.mxu0 0
        %1150 = vmatpush1.bf16.msra.mxu0 0
        %1151 = vmatprep.subr.bf16.mxu0 0
        %1152 = vmatpush1.bf16.msra.mxu0 0
        %1153 = vmatprep.subr.bf16.mxu0 0
        %1154 = vmatpush1.bf16.msra.mxu0 0
        %1155 = vmatprep.subr.bf16.mxu0 0
        %1156 = vmatpush1.bf16.msra.mxu0 0
        %1157 = vmatprep.subr.bf16.mxu0 0
        %1158 = vmatpush1.bf16.msra.mxu0 0
        %1159 = vmatprep.subr.bf16.mxu0 0
        %1160 = vmatpush1.bf16.msra.mxu0 0
        %1161 = vmatprep.subr.bf16.mxu0 0
        %1162 = vmatpush1.bf16.msra.mxu0 0
        %1163 = vmatprep.subr.bf16.mxu0 0
        %1164 = vmatpush1.bf16.msra.mxu0 0
        %1165 = vmatprep.subr.bf16.mxu0 0
        %1166 = vmatpush1.bf16.msra.mxu0 0
        %1167 = vmatprep.subr.bf16.mxu0 0
        %1168 = vmatpush1.bf16.msra.mxu0 0
        %1169 = vmatprep.subr.bf16.mxu0 0
        %1170 = vmatpush1.bf16.msra.mxu0 0
        %1171 = vmatprep.mubr.bf16.mxu0 0
        %1172 = vmatmul.mubr.bf16.gmra.mrb[0].mxu0 %v1134
        %v1173 = vpop.f32.mrb[0].mxu0
        %v1174 = vadd.f32 0.0, %v1173
        %v1175 = vpop.f32.mrb[0].mxu0
        %v1176 = vpop.f32.mrb[0].mxu0
        %v1177 = vadd.f32 0.0, %v1176
        %v1178 = vpop.f32.mrb[0].mxu0
        %1179 = vdwg.mxu0
        %v1180 = vpack.c.bf16 %v1177, %v1174
        %v1183 = vunpack.c.l.b16 %v920
        %v1184 = vunpack.c.l.b16 %v921
        %v1185 = vpack.c.b16 %v1184, %v1183
        %v1188 = vsel %vm926, %v1180, 0
        %1190 = vmatprep.subr.bf16.mxu0 0
        %1191 = vmatpush1.bf16.msra.mxu0 %v1185
        %1192 = vmatprep.subr.bf16.mxu0 0
        %1193 = vmatpush1.bf16.msra.mxu0 0
        %1194 = vmatprep.subr.bf16.mxu0 0
        %1195 = vmatpush1.bf16.msra.mxu0 0
        %1196 = vmatprep.subr.bf16.mxu0 0
        %1197 = vmatpush1.bf16.msra.mxu0 0
        %1198 = vmatprep.subr.bf16.mxu0 0
        %1199 = vmatpush1.bf16.msra.mxu0 0
        %1200 = vmatprep.subr.bf16.mxu0 0
        %1201 = vmatpush1.bf16.msra.mxu0 0
        %1202 = vmatprep.subr.bf16.mxu0 0
        %1203 = vmatpush1.bf16.msra.mxu0 0
        %1204 = vmatprep.subr.bf16.mxu0 0
        %1205 = vmatpush1.bf16.msra.mxu0 0
        %1206 = vmatprep.subr.bf16.mxu0 0
        %1207 = vmatpush1.bf16.msra.mxu0 0
        %1208 = vmatprep.subr.bf16.mxu0 0
        %1209 = vmatpush1.bf16.msra.mxu0 0
        %1210 = vmatprep.subr.bf16.mxu0 0
        %1211 = vmatpush1.bf16.msra.mxu0 0
        %1212 = vmatprep.subr.bf16.mxu0 0
        %1213 = vmatpush1.bf16.msra.mxu0 0
        %1214 = vmatprep.subr.bf16.mxu0 0
        %1215 = vmatpush1.bf16.msra.mxu0 0
        %1216 = vmatprep.subr.bf16.mxu0 0
        %1217 = vmatpush1.bf16.msra.mxu0 0
        %1218 = vmatprep.subr.bf16.mxu0 0
        %1219 = vmatpush1.bf16.msra.mxu0 0
        %1220 = vmatprep.subr.bf16.mxu0 0
        %1221 = vmatpush1.bf16.msra.mxu0 0
        %1222 = vmatprep.mubr.bf16.mxu0 0
        %1223 = vmatmul.mubr.bf16.gmra.mrb[0].mxu0 %v1188
        %v1224 = vpop.f32.mrb[0].mxu0
        %v1225 = vadd.f32 0.0, %v1224
        %v1226 = vpop.f32.mrb[0].mxu0
        %v1227 = vpop.f32.mrb[0].mxu0
        %v1228 = vadd.f32 0.0, %v1227
        %v1229 = vpop.f32.mrb[0].mxu0
        %1230 = vdwg.mxu0
        %v1233 = vunpack.c.l.b16 %v918
        %v1234 = vunpack.c.l.b16 %v919
        %v1235 = vpack.c.b16 %v1234, %v1233
        %v1238 = vsel %vm926, %v1054, 0
        %1240 = vmatprep.subr.bf16.mxu0 0
        %1241 = vmatpush1.bf16.msra.mxu0 %v1235
        %1242 = vmatprep.subr.bf16.mxu0 0
        %1243 = vmatpush1.bf16.msra.mxu0 0
        %1244 = vmatprep.subr.bf16.mxu0 0
        %1245 = vmatpush1.bf16.msra.mxu0 0
        %1246 = vmatprep.subr.bf16.mxu0 0
        %1247 = vmatpush1.bf16.msra.mxu0 0
        %1248 = vmatprep.subr.bf16.mxu0 0
        %1249 = vmatpush1.bf16.msra.mxu0 0
        %1250 = vmatprep.subr.bf16.mxu0 0
        %1251 = vmatpush1.bf16.msra.mxu0 0
        %1252 = vmatprep.subr.bf16.mxu0 0
        %1253 = vmatpush1.bf16.msra.mxu0 0
        %1254 = vmatprep.subr.bf16.mxu0 0
        %1255 = vmatpush1.bf16.msra.mxu0 0
        %1256 = vmatprep.subr.bf16.mxu0 0
        %1257 = vmatpush1.bf16.msra.mxu0 0
        %1258 = vmatprep.subr.bf16.mxu0 0
        %1259 = vmatpush1.bf16.msra.mxu0 0
        %1260 = vmatprep.subr.bf16.mxu0 0
        %1261 = vmatpush1.bf16.msra.mxu0 0
        %1262 = vmatprep.subr.bf16.mxu0 0
        %1263 = vmatpush1.bf16.msra.mxu0 0
        %1264 = vmatprep.subr.bf16.mxu0 0
        %1265 = vmatpush1.bf16.msra.mxu0 0
        %1266 = vmatprep.subr.bf16.mxu0 0
        %1267 = vmatpush1.bf16.msra.mxu0 0
        %1268 = vmatprep.subr.bf16.mxu0 0
        %1269 = vmatpush1.bf16.msra.mxu0 0
        %1270 = vmatprep.subr.bf16.mxu0 0
        %1271 = vmatpush1.bf16.msra.mxu0 0
        %1272 = vmatprep.mubr.bf16.mxu0 0
        %1273 = vmatmul.mubr.bf16.gmra.mrb[0].mxu0 %v1238
        %v1274 = vpop.f32.mrb[0].mxu0
        %v1275 = vadd.f32 %v1225, %v1274
        %v1276 = vpop.f32.mrb[0].mxu0
        %v1277 = vpop.f32.mrb[0].mxu0
        %v1278 = vadd.f32 %v1228, %v1277
        %v1279 = vpop.f32.mrb[0].mxu0
        %1280 = vdwg.mxu0
        %v1281 = vadd.f32 %v801, %v1275
        %v1282 = vadd.f32 %v802, %v1278
        %v1283 = vld [vmem:[%s718] sm:$0x1]
        %v1285 = vlaneseq
        %v1286 = vshrl.u32 %v1285, 7
        %v1287 = vsub.s32 0, %v1286
        %v1288 = vrot.slane %v1283, %v1287
        %v1290 = vadd.f32 %v1281, %v1288
        %v1291 = vadd.f32 %v1282, %v1288
        %v1292 = vld [vmem:[%s743] sm:$0x1]
        %v1293 = vld [vmem:[%s746] sm:$0x1]
        %v1294 = vsel %vm805, %v1290, 0.0
        %1295 = vadd.xlane.f32.xlu0 %v1294
        %v1296 = vpop.xlane.xlu0 %1295
        %v1297 = vsel %vm809, %v1291, 0.0
        %1298 = vadd.xlane.f32.xlu0 %v1297
        %v1299 = vpop.xlane.xlu0 %1298
        %v1300 = vmul.f32 %v1296, %v813
        %v1301 = vmul.f32 %v1299, %v813
        %v1302 = vsub.f32 %v1290, %v1300
        %v1303 = vsub.f32 %v1291, %v1301
        %v1304 = vmul.f32 %v1302, %v1302
        %v1305 = vmul.f32 %v1303, %v1303
        %v1306 = vsel %vm805, %v1304, 0.0
        %1307 = vadd.xlane.f32.xlu0 %v1306
        %v1308 = vpop.xlane.xlu0 %1307
        %v1309 = vsel %vm809, %v1305, 0.0
        %1310 = vadd.xlane.f32.xlu0 %v1309
        %v1311 = vpop.xlane.xlu0 %1310
        %v1312 = vmul.f32 %v1308, %v813
        %v1313 = vmul.f32 %v1311, %v813
        %v1314 = vadd.f32 %v1312, 1e-06
        %v1315 = vadd.f32 %v1313, 1e-06
        %v1316 = vrsqrt.pop %v1314
        %v1317 = vrsqrt.pop %v1315
        %v1318 = vmul.f32 %v1302, %v1316
        %v1319 = vmul.f32 %v1303, %v1317
        %v1321 = vlaneseq
        %v1322 = vshrl.u32 %v1321, 7
        %v1323 = vsub.s32 0, %v1322
        %v1324 = vrot.slane %v1292, %v1323
        %v1326 = vmul.f32 %v1318, %v1324
        %v1327 = vmul.f32 %v1319, %v1324
        %v1329 = vlaneseq
        %v1330 = vshrl.u32 %v1329, 7
        %v1331 = vsub.s32 0, %v1330
        %v1332 = vrot.slane %v1293, %v1331
        %v1334 = vadd.f32 %v1326, %v1332
        %v1335 = vadd.f32 %v1327, %v1332
        %v1336 = vpack.c.bf16 %v1335, %v1334
        %v1337 = vld [vmem:[%s729] sm:$0xf]
        %v1338 = vld [vmem:[%s729 + $0x4] sm:$0xf]
        %v1339 = vld [vmem:[%s729 + $0x8] sm:$0xf]
        %v1340 = vld [vmem:[%s729 + $0xc] sm:$0xf]
        %v1341 = vld [vmem:[%s732] sm:$0x1]
        %v1343 = vlaneseq
        %v1344 = vshrl.u32 %v1343, 7
        %v1345 = vsub.s32 0, %v1344
        %v1346 = vrot.slane %v1341, %v1345
        %v1352 = vunpack.c.l.b16 %v1337
        %v1353 = vunpack.c.l.b16 %v1338
        %v1354 = vunpack.c.l.b16 %v1339
        %v1355 = vunpack.c.l.b16 %v1340
        %v1356 = vpack.c.b16 %v1353, %v1352
        %v1357 = vpack.c.b16 %v1355, %v1354
        %v1361 = vsel %vm805, %v1336, 0
        %1363 = vmatprep.subr.bf16.mxu0 0
        %1364 = vmatpush1.bf16.msra.mxu0 %v1356
        %1365 = vmatprep.subr.bf16.mxu0 0
        %1366 = vmatpush1.bf16.msra.mxu0 %v1357
        %1367 = vmatprep.subr.bf16.mxu0 0
        %1368 = vmatpush1.bf16.msra.mxu0 0
        %1369 = vmatprep.subr.bf16.mxu0 0
        %1370 = vmatpush1.bf16.msra.mxu0 0
        %1371 = vmatprep.subr.bf16.mxu0 0
        %1372 = vmatpush1.bf16.msra.mxu0 0
        %1373 = vmatprep.subr.bf16.mxu0 0
        %1374 = vmatpush1.bf16.msra.mxu0 0
        %1375 = vmatprep.subr.bf16.mxu0 0
        %1376 = vmatpush1.bf16.msra.mxu0 0
        %1377 = vmatprep.subr.bf16.mxu0 0
        %1378 = vmatpush1.bf16.msra.mxu0 0
        %1379 = vmatprep.subr.bf16.mxu0 0
        %1380 = vmatpush1.bf16.msra.mxu0 0
        %1381 = vmatprep.subr.bf16.mxu0 0
        %1382 = vmatpush1.bf16.msra.mxu0 0
        %1383 = vmatprep.subr.bf16.mxu0 0
        %1384 = vmatpush1.bf16.msra.mxu0 0
        %1385 = vmatprep.subr.bf16.mxu0 0
        %1386 = vmatpush1.bf16.msra.mxu0 0
        %1387 = vmatprep.subr.bf16.mxu0 0
        %1388 = vmatpush1.bf16.msra.mxu0 0
        %1389 = vmatprep.subr.bf16.mxu0 0
        %1390 = vmatpush1.bf16.msra.mxu0 0
        %1391 = vmatprep.subr.bf16.mxu0 0
        %1392 = vmatpush1.bf16.msra.mxu0 0
        %1393 = vmatprep.subr.bf16.mxu0 0
        %1394 = vmatpush1.bf16.msra.mxu0 0
        %1395 = vmatprep.mubr.bf16.mxu0 0
        %1396 = vmatmul.mubr.bf16.gmra.mrb[0].mxu0 %v1361
        %v1397 = vpop.f32.mrb[0].mxu0
        %v1398 = vadd.f32 %v1346, %v1397
        %v1399 = vpop.f32.mrb[0].mxu0
        %v1400 = vpop.f32.mrb[0].mxu0
        %v1401 = vadd.f32 %v1346, %v1400
        %v1402 = vpop.f32.mrb[0].mxu0
        %1403 = vdwg.mxu0
        %v1404 = vmul.f32 %v1398, 0.5
        %v1405 = vmul.f32 %v1401, 0.5
        %v1406 = vmul.f32 %v1398, %v1398
        %v1407 = vmul.f32 %v1401, %v1401
        %v1408 = vmul.f32 %v1398, %v1406
        %v1409 = vmul.f32 %v1401, %v1407
        %v1410 = vmul.f32 %v1408, 0.044715
        %v1411 = vmul.f32 %v1409, 0.044715
        %v1412 = vadd.f32 %v1398, %v1410
        %v1413 = vadd.f32 %v1401, %v1411
        %v1414 = vmul.f32 %v1412, 0.7978846
        %v1415 = vmul.f32 %v1413, 0.7978846
        %v1416 = vtanh.pop %v1414
        %v1417 = vtanh.pop %v1415
        %v1418 = vadd.f32 %v1416, 1.0
        %v1419 = vadd.f32 %v1417, 1.0
        %v1420 = vmul.f32 %v1404, %v1418
        %v1421 = vmul.f32 %v1405, %v1419
        %v1422 = vpack.c.bf16 %v1421, %v1420
        %v1423 = vld [vmem:[%s737] sm:$0xf]
        %v1424 = vld [vmem:[%s737 + $0x4] sm:$0xf]
        %v1425 = vld [vmem:[%s737 + $0x8] sm:$0xf]
        %v1426 = vld [vmem:[%s737 + $0xc] sm:$0xf]
        %v1427 = vld [vmem:[%s737 + $0x10] sm:$0xf]
        %v1428 = vld [vmem:[%s737 + $0x14] sm:$0xf]
        %v1429 = vld [vmem:[%s737 + $0x18] sm:$0xf]
        %v1430 = vld [vmem:[%s737 + $0x1c] sm:$0xf]
        %v1431 = vld [vmem:[%s737 + $0x20] sm:$0xf]
        %v1432 = vld [vmem:[%s737 + $0x24] sm:$0xf]
        %v1433 = vld [vmem:[%s737 + $0x28] sm:$0xf]
        %v1434 = vld [vmem:[%s737 + $0x2c] sm:$0xf]
        %v1435 = vld [vmem:[%s737 + $0x30] sm:$0xf]
        %v1436 = vld [vmem:[%s737 + $0x34] sm:$0xf]
        %v1437 = vld [vmem:[%s737 + $0x38] sm:$0xf]
        %v1438 = vld [vmem:[%s737 + $0x3c] sm:$0xf]
        %v1439 = vld [vmem:[%s740] sm:$0x1]
        %v1441 = vlaneseq
        %v1442 = vshrl.u32 %v1441, 7
        %v1443 = vsub.s32 0, %v1442
        %v1444 = vrot.slane %v1439, %v1443
        %v1462 = vunpack.c.l.b16 %v1423
        %v1463 = vunpack.c.l.b16 %v1424
        %v1464 = vunpack.c.l.b16 %v1425
        %v1465 = vunpack.c.l.b16 %v1426
        %v1466 = vunpack.c.l.b16 %v1427
        %v1467 = vunpack.c.l.b16 %v1428
        %v1468 = vunpack.c.l.b16 %v1429
        %v1469 = vunpack.c.l.b16 %v1430
        %v1470 = vunpack.c.l.b16 %v1431
        %v1471 = vunpack.c.l.b16 %v1432
        %v1472 = vunpack.c.l.b16 %v1433
        %v1473 = vunpack.c.l.b16 %v1434
        %v1474 = vunpack.c.l.b16 %v1435
        %v1475 = vunpack.c.l.b16 %v1436
        %v1476 = vunpack.c.l.b16 %v1437
        %v1477 = vunpack.c.l.b16 %v1438
        %v1478 = vpack.c.b16 %v1463, %v1462
        %v1479 = vpack.c.b16 %v1465, %v1464
        %v1480 = vpack.c.b16 %v1467, %v1466
        %v1481 = vpack.c.b16 %v1469, %v1468
        %v1482 = vpack.c.b16 %v1471, %v1470
        %v1483 = vpack.c.b16 %v1473, %v1472
        %v1484 = vpack.c.b16 %v1475, %v1474
        %v1485 = vpack.c.b16 %v1477, %v1476
        %1494 = vmatprep.subr.bf16.mxu0 0
        %1495 = vmatpush1.bf16.msra.mxu0 %v1478
        %1496 = vmatprep.subr.bf16.mxu0 0
        %1497 = vmatpush1.bf16.msra.mxu0 %v1479
        %1498 = vmatprep.subr.bf16.mxu0 0
        %1499 = vmatpush1.bf16.msra.mxu0 %v1480
        %1500 = vmatprep.subr.bf16.mxu0 0
        %1501 = vmatpush1.bf16.msra.mxu0 %v1481
        %1502 = vmatprep.subr.bf16.mxu0 0
        %1503 = vmatpush1.bf16.msra.mxu0 %v1482
        %1504 = vmatprep.subr.bf16.mxu0 0
        %1505 = vmatpush1.bf16.msra.mxu0 %v1483
        %1506 = vmatprep.subr.bf16.mxu0 0
        %1507 = vmatpush1.bf16.msra.mxu0 %v1484
        %1508 = vmatprep.subr.bf16.mxu0 0
        %1509 = vmatpush1.bf16.msra.mxu0 %v1485
        %1510 = vmatprep.subr.bf16.mxu0 0
        %1511 = vmatpush1.bf16.msra.mxu0 0
        %1512 = vmatprep.subr.bf16.mxu0 0
        %1513 = vmatpush1.bf16.msra.mxu0 0
        %1514 = vmatprep.subr.bf16.mxu0 0
        %1515 = vmatpush1.bf16.msra.mxu0 0
        %1516 = vmatprep.subr.bf16.mxu0 0
        %1517 = vmatpush1.bf16.msra.mxu0 0
        %1518 = vmatprep.subr.bf16.mxu0 0
        %1519 = vmatpush1.bf16.msra.mxu0 0
        %1520 = vmatprep.subr.bf16.mxu0 0
        %1521 = vmatpush1.bf16.msra.mxu0 0
        %1522 = vmatprep.subr.bf16.mxu0 0
        %1523 = vmatpush1.bf16.msra.mxu0 0
        %1524 = vmatprep.subr.bf16.mxu0 0
        %1525 = vmatpush1.bf16.msra.mxu0 0
        %1526 = vmatprep.mubr.bf16.mxu0 0
        %1527 = vmatmul.mubr.bf16.gmra.mrb[0].mxu0 %v1422
        %v1528 = vpop.f32.mrb[0].mxu0
        %v1529 = vadd.f32 %v1444, %v1528
        %v1530 = vpop.f32.mrb[0].mxu0
        %v1531 = vpop.f32.mrb[0].mxu0
        %v1532 = vadd.f32 %v1444, %v1531
        %v1533 = vpop.f32.mrb[0].mxu0
        %1534 = vdwg.mxu0
        %v1535 = vadd.f32 %v1290, %v1529
        %v1536 = vadd.f32 %v1291, %v1532
        %1537 = vst.msk [vmem:[#allocation2] sm:$0xff] %vm805, %v1535
        %1538 = vst.msk [vmem:[#allocation2 + $0x8] sm:$0x1] %vm809, %v1536
        %p1539 = scmp.eq.s32.totalorder %s36, 1
        // Predicated region
        $region93: #{tpu_custom_call.1} parent=87 // pred_check
          %p1540 = pneg %p1539
        $region94: #{tpu_custom_call.1} parent=87 // pred_check_branch
          %1542 = sbr.rel (%p1540) target = $region96
        $region95: #{tpu_custom_call.1} parent=87 // pred_region
          %1543 = vst.msk [vmem:[%s698] sm:$0x1] %vm809, %v1535
        $region96: #{tpu_custom_call.1} parent=87 // pred_fallthru
          _
        %s1544 = sand.u32 %s473, 1
        %s1545 = scalar_lea.sflag [#allocation4], %s1544
        %s1546 = sand.u32 %s473, 1
        %s1547 = scalar_lea.vmem [#allocation3], %s1546
        // Predicated region
        $region97: #{tpu_custom_call.1} parent=87 // pred_check
          %p1548 = pneg %p483
        $region98: #{tpu_custom_call.1} parent=87 // pred_check_branch
          %1550 = sbr.rel (%p1548) target = $region100
        $region99: #{tpu_custom_call.1} parent=87 // pred_region
          %s1552 = ssub.s32 16, 16
          %1553 = vsyncadd %s1545, %s1552
          %s1554 = smul.addr %s35, 16
          %s1555 = scalar_lea.hbm %s17, %s1554
          %s1557 = sshll.u32 %s1547, 4
          %s1558 = int_to_ptr.vmem [resolvable:$true] %s1557
          %1560 = dma.vmem_to_hbm [thread:$0]  %s1558, 16, %s1555, %s1545
        $region100: #{tpu_custom_call.1} parent=87 // pred_fallthru
          _
      $region88: #{tpu_custom_call.1} parent=5 // pred_fallthru
        _
      %p1561 = scmp.le.s32.totalorder 2, %s26
      // Predicated region
      $region101: #{tpu_custom_call.1} parent=5 // pred_check
        %p1562 = pneg %p1561
      $region102: #{tpu_custom_call.1} parent=5 // pred_check_branch
        %1564 = sbr.rel (%p1562) target = $region104
      $region103: #{tpu_custom_call.1} parent=5 // pred_region
        %s1565 = ssub.s32 %s26, 2
        // Predicated region
        $region105: #{tpu_custom_call.1} parent=103 // pred_check
          %p1566 = pneg %p489
        $region106: #{tpu_custom_call.1} parent=103 // pred_check_branch
          %1568 = sbr.rel (%p1566) target = $region108
        $region107: #{tpu_custom_call.1} parent=103 // pred_region
          %s1569 = sand.u32 %s474, 1
          %s1570 = scalar_lea.sflag [#allocation4], %s1569
          %s1571 = sand.u32 %s474, 1
          %s1572 = scalar_lea.vmem [#allocation3], %s1571
          %1573 = dma.done %s1570, 16
        $region108: #{tpu_custom_call.1} parent=103 // pred_fallthru
          _
      $region104: #{tpu_custom_call.1} parent=5 // pred_fallthru
        _
    $region6: #{tpu_custom_call.1} parent=1 // loop_footer
      %s30 = sadd.s32 1, %s26
    $region7: #{tpu_custom_call.1} parent=1 // loop_footer_branch
      %25 = sbr.rel target = $region3
    $region8: #{tpu_custom_call.1} parent=1 // loop_exit
      _
    %1574 = vsyncpa [#allocation4], 1
    %s1575 = scalar_lea.sflag [#allocation4], 1
    %1576 = vsyncpa %s1575, 1

</llo_original>
